<compile_context>
chip_gen: v7x
topology: tpu7x:2x2x1
jax: 0.10.0
libtpu: 0.0.40
codegen_flags: <defaults>
</compile_context>

<pallas_src>
import functools
import math

import jax
import jax.numpy as jnp
from jax.experimental import pallas as pl
from jax.experimental.pallas import tpu as pltpu


# ----------------------------- in-kernel helpers -----------------------------

def _layernorm(x, gamma, beta, eps=1e-5):
    # PyTorch nn.LayerNorm over last dim (biased variance, eps=1e-5); stats in f32.
    mean = jnp.mean(x, axis=-1, keepdims=True)
    var = jnp.mean((x - mean) ** 2, axis=-1, keepdims=True)
    return (x - mean) * jax.lax.rsqrt(var + eps) * gamma + beta


# ----------------------------- fused encoder kernel --------------------------

def fused_encoder_kernel(num_heads,
                         x_ref,
                         wqkv_ref, bqkv_ref, wo_ref, bo_ref,
                         g1_ref, be1_ref,
                         w1_ref, b1_ref, w2_ref, b2_ref,
                         g2_ref, be2_ref,
                         gf_ref, bef_ref,
                         o_ref):
    l = pl.program_id(1)
    n_layers = pl.num_programs(1)

    S, D = o_ref.shape                  # per-batch block: S rows, D = d_model
    H = num_heads
    dk = D // H

    # Seed the VMEM-resident output block with the embedded input of this batch block.
    @pl.when(l == 0)
    def _():
        o_ref[...] = x_ref[...]

    x = o_ref[...]                      # (S, D) f32 — previous layer's output (or the input)
    x_bf = x.astype(jnp.bfloat16)

    # --- fused QKV projection: ONE (S,D)@(D,3D) matmul (1/sqrt(dk) pre-folded into Q cols) ---
    qkv = jnp.dot(x_bf, wqkv_ref[0],
                  preferred_element_type=jnp.float32) + bqkv_ref[0]      # (S, 3D) f32

    def split_heads(t2d):               # (S, D) -> (H, S, dk), static head slices
        return jnp.stack([t2d[:, h * dk:(h + 1) * dk] for h in range(H)], axis=0)

    q = split_heads(qkv[:, 0 * D:1 * D]).astype(jnp.bfloat16)
    k = split_heads(qkv[:, 1 * D:2 * D]).astype(jnp.bfloat16)
    v = split_heads(qkv[:, 2 * D:3 * D]).astype(jnp.bfloat16)

    # --- self-attention within this batch block (no cross-batch masking needed) --------------
    # TODO(synk): user-supplied attention mask path not implemented (forward uses mask=None).
    # TODO(synk): flash-style key-block tiling would be needed for very long sequences;
    #             scores here are only (H, S, S) per batch block.
    scores = jnp.einsum('hqd,hkd->hqk', q, k,
                        preferred_element_type=jnp.float32)              # (H, S, S) f32
    scores = scores - jnp.max(scores, axis=-1, keepdims=True)
    p = jnp.exp(scores)
    p = p / jnp.sum(p, axis=-1, keepdims=True)                           # exact softmax

    ctx = jnp.einsum('hqk,hkd->hqd', p.astype(jnp.bfloat16), v,
                     preferred_element_type=jnp.float32)                 # (H, S, dk) f32

    # --- output projection: concat(heads) @ Wo as ONE lane-dense matmul ----------------------
    ctx2d = jnp.concatenate([ctx[h] for h in range(H)],
                            axis=-1).astype(jnp.bfloat16)                # (S, D) bf16
    attn = jnp.dot(ctx2d, wo_ref[0],
                   preferred_element_type=jnp.float32) + bo_ref[0]       # (S, D) f32

    # --- add & norm 1 -------------------------------------------------------------------------
    x1 = _layernorm(x + attn, g1_ref[0], be1_ref[0])

    # --- position-wise feed forward (Linear -> ReLU -> Linear) --------------------------------
    # TODO(synk): dropout from the reference module is omitted (eval-mode forward only).
    h1 = jnp.maximum(
        jnp.dot(x1.astype(jnp.bfloat16), w1_ref[0],
                preferred_element_type=jnp.float32) + b1_ref[0], 0.0)
    ff = jnp.dot(h1.astype(jnp.bfloat16), w2_ref[0],
                 preferred_element_type=jnp.float32) + b2_ref[0]

    # --- add & norm 2 -------------------------------------------------------------------------
    x2 = _layernorm(x1 + ff, g2_ref[0], be2_ref[0])

    # Carry to the next layer in the (VMEM-resident) output block; fold the encoder's final
    # LayerNorm into the last layer iteration.
    @pl.when(l < n_layers - 1)
    def _():
        o_ref[...] = x2

    @pl.when(l == n_layers - 1)
    def _():
        o_ref[...] = _layernorm(x2, gf_ref[...], bef_ref[...])


# ----------------------------- pallas_call wrapper ----------------------------

_WEIGHT_NAMES = ["wqkv", "bqkv", "wo", "bo", "g1", "be1",
                 "w1", "b1", "w2", "b2", "g2", "be2"]


def fused_encoder_forward(x2d, params, num_heads, seq):
    M, D = x2d.shape
    B = M // seq
    L = params["wqkv"].shape[0]
    d_ff = params["w1"].shape[-1]

    weights = [params[n] for n in _WEIGHT_NAMES]

    def per_layer_spec(arr):
        blk = (1,) + arr.shape[1:]
        zeros = (0,) * (arr.ndim - 1)
        return pl.BlockSpec(blk, lambda b, l, _z=zeros: (l,) + _z)

    in_specs = [pl.BlockSpec((seq, D), lambda b, l: (b, 0))]        # embedded input (read at l==0)
    in_specs += [per_layer_spec(w) for w in weights]                # stacked per-layer weights
    in_specs += [pl.BlockSpec((1, D), lambda b, l: (0, 0)),         # final LN gamma
                 pl.BlockSpec((1, D), lambda b, l: (0, 0))]         # final LN beta

    # --- explicit VMEM budget: double-buffered per-layer weights + activations + attention ----
    def blk_bytes(a):
        return int(math.prod(a.shape[1:])) * a.dtype.itemsize

    est = (2 * sum(blk_bytes(w) for w in weights)       # pipelined (double-buffered) weight blocks
           + 3 * seq * D * 4                            # input block (x2 buffers) + resident output
           + seq * 3 * D * 4                            # fused qkv (f32)
           + num_heads * seq * seq * 6                  # scores (f32) + probabilities (bf16)
           + num_heads * seq * (D // num_heads) * 4     # per-head context (f32)
           + seq * d_ff * 4                             # FFN hidden (f32)
           + (1 << 20))                                 # slack for relayout temporaries
    try:
        vmem_cap = pltpu.get_tpu_info().vmem_capacity_bytes
    except Exception:
        vmem_cap = 64 * 1024 * 1024                     # conservative (v7x per-TC) fallback
    vmem_limit = int(min(max(2 * est, 16 * 1024 * 1024), int(0.75 * vmem_cap)))

    kernel = functools.partial(fused_encoder_kernel, num_heads)

    return pl.pallas_call(
        kernel,
        out_shape=jax.ShapeDtypeStruct((M, D), jnp.float32),
        grid_spec=pltpu.PrefetchScalarGridSpec(
            num_scalar_prefetch=0,
            grid=(B, L),
            in_specs=in_specs,
            out_specs=pl.BlockSpec((seq, D), lambda b, l: (b, 0)),
            scratch_shapes=[]),
        compiler_params=pltpu.CompilerParams(
            dimension_semantics=("parallel", "arbitrary"),
            vmem_limit_bytes=vmem_limit),
    )(x2d, *weights, params["gf"], params["bef"])


# ----------------------------- parameter construction ------------------------

def make_positional_encoding(d_model, max_len):
    position = jnp.arange(max_len, dtype=jnp.float32)[:, None]
    div_term = jnp.exp(jnp.arange(0, d_model, 2, dtype=jnp.float32)
                       * (-math.log(10000.0) / d_model))
    pe = jnp.zeros((max_len, d_model), dtype=jnp.float32)
    pe = pe.at[:, 0::2].set(jnp.sin(position * div_term))
    pe = pe.at[:, 1::2].set(jnp.cos(position * div_term))
    return pe


def init_params(key, vocab_size, d_model, d_ff, num_layers, num_heads, max_len):
    H = num_heads
    dk = d_model // H
    scale = 1.0 / math.sqrt(dk)

    def dense(k, din, dout):
        return 0.02 * jax.random.normal(k, (din, dout), dtype=jnp.float32)

    keys = jax.random.split(key, 1 + num_layers)
    emb = 0.02 * jax.random.normal(keys[0], (vocab_size, d_model), dtype=jnp.float32)

    wqkv_l, bqkv_l, wo_l, bo_l = [], [], [], []
    g1_l, be1_l, g2_l, be2_l = [], [], [], []
    w1_l, b1_l, w2_l, b2_l = [], [], [], []
    for l in range(num_layers):
        kq, kk, kv, ko, k1, k2 = jax.random.split(keys[1 + l], 6)
        wq = dense(kq, d_model, d_model)
        wk = dense(kk, d_model, d_model)
        wv = dense(kv, d_model, d_model)
        wo = dense(ko, d_model, d_model)
        bq = bk = bv = jnp.zeros((d_model,), jnp.float32)
        bo = jnp.zeros((d_model,), jnp.float32)
        w1, b1 = dense(k1, d_model, d_ff), jnp.zeros((d_ff,), jnp.float32)
        w2, b2 = dense(k2, d_ff, d_model), jnp.zeros((d_model,), jnp.float32)

        # fused QKV weight (D, 3D); 1/sqrt(dk) pre-folded into the Q columns (and Q bias).
        wqkv_l.append(jnp.concatenate([wq * scale, wk, wv], axis=1))
        bqkv_l.append(jnp.concatenate([bq * scale, bk, bv])[None, :])     # (1, 3D)
        wo_l.append(wo)                                                   # (D, D)
        bo_l.append(bo[None, :])                                          # (1, D)
        g1_l.append(jnp.ones((1, d_model), jnp.float32))
        be1_l.append(jnp.zeros((1, d_model), jnp.float32))
        g2_l.append(jnp.ones((1, d_model), jnp.float32))
        be2_l.append(jnp.zeros((1, d_model), jnp.float32))
        w1_l.append(w1); b1_l.append(b1[None, :])
        w2_l.append(w2); b2_l.append(b2[None, :])

    stack = lambda xs: jnp.stack(xs, axis=0)
    return {
        "embedding": emb,
        "pe": make_positional_encoding(d_model, max_len),
        # matmul weights in bf16 (MXU-native, half the DMA bytes); biases / LN params in f32
        "wqkv": stack(wqkv_l).astype(jnp.bfloat16), "bqkv": stack(bqkv_l),
        "wo": stack(wo_l).astype(jnp.bfloat16), "bo": stack(bo_l),
        "g1": stack(g1_l), "be1": stack(be1_l),
        "w1": stack(w1_l).astype(jnp.bfloat16), "b1": stack(b1_l),
        "w2": stack(w2_l).astype(jnp.bfloat16), "b2": stack(b2_l),
        "g2": stack(g2_l), "be2": stack(be2_l),
        "gf": jnp.ones((1, d_model), jnp.float32),
        "bef": jnp.zeros((1, d_model), jnp.float32),
    }


# ----------------------------- full forward ----------------------------------

@functools.partial(jax.jit, static_argnums=(2,))
def transformer_encoder(src, params, num_heads):
    # embedding lookup + positional encoding (glue: gather / broadcast add outside the kernel)
    B, S = src.shape
    D = params["embedding"].shape[1]
    x = params["embedding"][src] + params["pe"][:S][None, :, :]      # (B, S, D) f32
    x2d = x.reshape(B * S, D)                                        # fold (B, S) -> rows
    y2d = fused_encoder_forward(x2d, params, num_heads, S)           # single Pallas kernel
    return y2d.reshape(B, S, D)


# ----------------------------- main -------------------------------------------

if __name__ == "__main__":
    vocab_size, d_model, num_heads, d_ff, num_layers, max_len = 100, 32, 4, 64, 2, 512
    B, S = 2, 8

    key = jax.random.PRNGKey(0)
    k_params, k_src = jax.random.split(key)
    params = init_params(k_params, vocab_size, d_model, d_ff, num_layers, num_heads, max_len)
    src = jax.random.randint(k_src, (B, S), 0, vocab_size, dtype=jnp.int32)

    out = transformer_encoder(src, params, num_heads)
    out = jax.block_until_ready(out)
    assert out.shape == (B, S, d_model)
    print("KERNEL_OK")
</pallas_src>

<mosaic_0001>
module attributes {stable_mosaic.version = 11 : i64} {
  func.func @fused_encoder_kernel(%arg0: i32, %arg1: i32, %arg2: memref<8x32xf32, #tpu.memory_space<vmem>>, %arg3: memref<1x32x96xbf16, #tpu.memory_space<vmem>>, %arg4: memref<1x1x96xf32, #tpu.memory_space<vmem>>, %arg5: memref<1x32x32xbf16, #tpu.memory_space<vmem>>, %arg6: memref<1x1x32xf32, #tpu.memory_space<vmem>>, %arg7: memref<1x1x32xf32, #tpu.memory_space<vmem>>, %arg8: memref<1x1x32xf32, #tpu.memory_space<vmem>>, %arg9: memref<1x32x64xbf16, #tpu.memory_space<vmem>>, %arg10: memref<1x1x64xf32, #tpu.memory_space<vmem>>, %arg11: memref<1x64x32xbf16, #tpu.memory_space<vmem>>, %arg12: memref<1x1x32xf32, #tpu.memory_space<vmem>>, %arg13: memref<1x1x32xf32, #tpu.memory_space<vmem>>, %arg14: memref<1x1x32xf32, #tpu.memory_space<vmem>>, %arg15: memref<1x32xf32, #tpu.memory_space<vmem>>, %arg16: memref<1x32xf32, #tpu.memory_space<vmem>>, %arg17: memref<8x32xf32, #tpu.memory_space<vmem>>) attributes {dimension_semantics = [#tpu.dimension_semantics<parallel>, #tpu.dimension_semantics<arbitrary>], iteration_bounds = array<i64: 2, 2>, scalar_prefetch = 0 : i64, scratch_operands = 0 : i64, tpu.core_type = #tpu.core_type<tc>, window_params = [{transform_indices = @transform_0, window_bounds = array<i64: 8, 32>}, {transform_indices = @transform_1, window_bounds = array<i64: 1, 32, 96>}, {transform_indices = @transform_2, window_bounds = array<i64: 1, 1, 96>}, {transform_indices = @transform_3, window_bounds = array<i64: 1, 32, 32>}, {transform_indices = @transform_4, window_bounds = array<i64: 1, 1, 32>}, {transform_indices = @transform_5, window_bounds = array<i64: 1, 1, 32>}, {transform_indices = @transform_6, window_bounds = array<i64: 1, 1, 32>}, {transform_indices = @transform_7, window_bounds = array<i64: 1, 32, 64>}, {transform_indices = @transform_8, window_bounds = array<i64: 1, 1, 64>}, {transform_indices = @transform_9, window_bounds = array<i64: 1, 64, 32>}, {transform_indices = @transform_10, window_bounds = array<i64: 1, 1, 32>}, {transform_indices = @transform_11, window_bounds = array<i64: 1, 1, 32>}, {transform_indices = @transform_12, window_bounds = array<i64: 1, 1, 32>}, {pipeline_mode = #tpu.pipeline_mode<synchronous>, transform_indices = @transform_13, window_bounds = array<i64: 1, 32>}, {pipeline_mode = #tpu.pipeline_mode<synchronous>, transform_indices = @transform_14, window_bounds = array<i64: 1, 32>}, {transform_indices = @transform_15, window_bounds = array<i64: 8, 32>}]} {
    %c0_i32 = arith.constant 0 : i32
    %0 = arith.cmpi eq, %arg1, %c0_i32 : i32
    %1 = arith.extui %0 : i1 to i32
    %c0_i32_0 = arith.constant 0 : i32
    %2 = arith.cmpi ne, %1, %c0_i32_0 : i32
    scf.if %2 {
      %c0_59 = arith.constant 0 : index
      %c0_60 = arith.constant 0 : index
      %152 = vector.load %arg2[%c0_59, %c0_60] : memref<8x32xf32, #tpu.memory_space<vmem>>, vector<8x32xf32>
      %c0_61 = arith.constant 0 : index
      %c0_62 = arith.constant 0 : index
      %153 = vector.load %arg17[%c0_61, %c0_62] : memref<8x32xf32, #tpu.memory_space<vmem>>, vector<8x32xf32>
      tpu.vector_store %arg17[%c0_61, %c0_62], %152 {strides = array<i32>} : memref<8x32xf32, #tpu.memory_space<vmem>>, vector<8x32xf32>,
    } else {
    }
    %c0 = arith.constant 0 : index
    %c0_1 = arith.constant 0 : index
    %3 = vector.load %arg17[%c0, %c0_1] : memref<8x32xf32, #tpu.memory_space<vmem>>, vector<8x32xf32>
    %4 = arith.truncf %3 : vector<8x32xf32> to vector<8x32xbf16>
    %c0_2 = arith.constant 0 : index
    %c0_3 = arith.constant 0 : index
    %c0_4 = arith.constant 0 : index
    %5 = vector.load %arg3[%c0_2, %c0_3, %c0_4] : memref<1x32x96xbf16, #tpu.memory_space<vmem>>, vector<1x32x96xbf16>
    %6 = vector.shape_cast %5 : vector<1x32x96xbf16> to vector<32x96xbf16>
    %cst = arith.constant dense<0.000000e+00> : vector<8x96xf32>
    %7 = tpu.matmul %4, %6, %cst {dimension_numbers = #tpu.dot_dimension_numbers<[1], [0], [0], [1], [0, 0, 1, 1], [], []>} : vector<8x32xbf16>, vector<32x96xbf16>, vector<8x96xf32> -> vector<8x96xf32>
    %c0_5 = arith.constant 0 : index
    %c0_6 = arith.constant 0 : index
    %c0_7 = arith.constant 0 : index
    %8 = vector.load %arg4[%c0_5, %c0_6, %c0_7] : memref<1x1x96xf32, #tpu.memory_space<vmem>>, vector<1x1x96xf32>
    %9 = vector.shape_cast %8 : vector<1x1x96xf32> to vector<1x96xf32>
    %10 = vector.broadcast %9 : vector<1x96xf32> to vector<8x96xf32>
    %11 = arith.addf %7, %10 : vector<8x96xf32>
    %12 = vector.extract_strided_slice %11 {offsets = [0, 0], sizes = [8, 32], strides = [1, 1]} : vector<8x96xf32> to vector<8x32xf32>
    %13 = vector.extract_strided_slice %12 {offsets = [0, 0], sizes = [8, 8], strides = [1, 1]} : vector<8x32xf32> to vector<8x8xf32>
    %14 = vector.extract_strided_slice %12 {offsets = [0, 8], sizes = [8, 8], strides = [1, 1]} : vector<8x32xf32> to vector<8x8xf32>
    %15 = vector.extract_strided_slice %12 {offsets = [0, 16], sizes = [8, 8], strides = [1, 1]} : vector<8x32xf32> to vector<8x8xf32>
    %16 = vector.extract_strided_slice %12 {offsets = [0, 24], sizes = [8, 8], strides = [1, 1]} : vector<8x32xf32> to vector<8x8xf32>
    %17 = vector.shape_cast %13 : vector<8x8xf32> to vector<1x8x8xf32>
    %18 = vector.shape_cast %14 : vector<8x8xf32> to vector<1x8x8xf32>
    %19 = vector.shape_cast %15 : vector<8x8xf32> to vector<1x8x8xf32>
    %20 = vector.shape_cast %16 : vector<8x8xf32> to vector<1x8x8xf32>
    %21 = tpu.concatenate %17, %18, %19, %20 in 0 : vector<1x8x8xf32>, vector<1x8x8xf32>, vector<1x8x8xf32>, vector<1x8x8xf32> -> vector<4x8x8xf32>
    %22 = arith.truncf %21 : vector<4x8x8xf32> to vector<4x8x8xbf16>
    %23 = vector.extract_strided_slice %11 {offsets = [0, 32], sizes = [8, 32], strides = [1, 1]} : vector<8x96xf32> to vector<8x32xf32>
    %24 = vector.extract_strided_slice %23 {offsets = [0, 0], sizes = [8, 8], strides = [1, 1]} : vector<8x32xf32> to vector<8x8xf32>
    %25 = vector.extract_strided_slice %23 {offsets = [0, 8], sizes = [8, 8], strides = [1, 1]} : vector<8x32xf32> to vector<8x8xf32>
    %26 = vector.extract_strided_slice %23 {offsets = [0, 16], sizes = [8, 8], strides = [1, 1]} : vector<8x32xf32> to vector<8x8xf32>
    %27 = vector.extract_strided_slice %23 {offsets = [0, 24], sizes = [8, 8], strides = [1, 1]} : vector<8x32xf32> to vector<8x8xf32>
    %28 = vector.shape_cast %24 : vector<8x8xf32> to vector<1x8x8xf32>
    %29 = vector.shape_cast %25 : vector<8x8xf32> to vector<1x8x8xf32>
    %30 = vector.shape_cast %26 : vector<8x8xf32> to vector<1x8x8xf32>
    %31 = vector.shape_cast %27 : vector<8x8xf32> to vector<1x8x8xf32>
    %32 = tpu.concatenate %28, %29, %30, %31 in 0 : vector<1x8x8xf32>, vector<1x8x8xf32>, vector<1x8x8xf32>, vector<1x8x8xf32> -> vector<4x8x8xf32>
    %33 = arith.truncf %32 : vector<4x8x8xf32> to vector<4x8x8xbf16>
    %34 = vector.extract_strided_slice %11 {offsets = [0, 64], sizes = [8, 32], strides = [1, 1]} : vector<8x96xf32> to vector<8x32xf32>
    %35 = vector.extract_strided_slice %34 {offsets = [0, 0], sizes = [8, 8], strides = [1, 1]} : vector<8x32xf32> to vector<8x8xf32>
    %36 = vector.extract_strided_slice %34 {offsets = [0, 8], sizes = [8, 8], strides = [1, 1]} : vector<8x32xf32> to vector<8x8xf32>
    %37 = vector.extract_strided_slice %34 {offsets = [0, 16], sizes = [8, 8], strides = [1, 1]} : vector<8x32xf32> to vector<8x8xf32>
    %38 = vector.extract_strided_slice %34 {offsets = [0, 24], sizes = [8, 8], strides = [1, 1]} : vector<8x32xf32> to vector<8x8xf32>
    %39 = vector.shape_cast %35 : vector<8x8xf32> to vector<1x8x8xf32>
    %40 = vector.shape_cast %36 : vector<8x8xf32> to vector<1x8x8xf32>
    %41 = vector.shape_cast %37 : vector<8x8xf32> to vector<1x8x8xf32>
    %42 = vector.shape_cast %38 : vector<8x8xf32> to vector<1x8x8xf32>
    %43 = tpu.concatenate %39, %40, %41, %42 in 0 : vector<1x8x8xf32>, vector<1x8x8xf32>, vector<1x8x8xf32>, vector<1x8x8xf32> -> vector<4x8x8xf32>
    %44 = arith.truncf %43 : vector<4x8x8xf32> to vector<4x8x8xbf16>
    "tpu.trace_start"() <{level = 10 : i32, message = "hqd,hkd->hqk"}> : () -> ()
    %cst_8 = arith.constant dense<0.000000e+00> : vector<4x8x8xf32>
    %45 = tpu.matmul %22, %33, %cst_8 {dimension_numbers = #tpu.dot_dimension_numbers<[2], [2], [1], [1], [0, 0, 0, 1, 1, 1], [0], [0]>} : vector<4x8x8xbf16>, vector<4x8x8xbf16>, vector<4x8x8xf32> -> vector<4x8x8xf32>
    "tpu.trace_stop"() : () -> ()
    %cst_9 = arith.constant dense<0xFF800000> : vector<4x8xf32>
    %46 = vector.multi_reduction <maximumf>, %45, %cst_9 [2] : vector<4x8x8xf32> to vector<4x8xf32>
    %47 = vector.shape_cast %46 : vector<4x8xf32> to vector<4x8x1xf32>
    %48 = vector.broadcast %47 : vector<4x8x1xf32> to vector<4x8x8xf32>
    %49 = arith.subf %45, %48 : vector<4x8x8xf32>
    %50 = math.exp %49 : vector<4x8x8xf32>
    %cst_10 = arith.constant dense<0.000000e+00> : vector<4x8xf32>
    %51 = vector.multi_reduction <add>, %50, %cst_10 [2] : vector<4x8x8xf32> to vector<4x8xf32>
    %52 = vector.shape_cast %51 : vector<4x8xf32> to vector<4x8x1xf32>
    %53 = vector.broadcast %52 : vector<4x8x1xf32> to vector<4x8x8xf32>
    %54 = arith.divf %50, %53 : vector<4x8x8xf32>
    %55 = arith.truncf %54 : vector<4x8x8xf32> to vector<4x8x8xbf16>
    "tpu.trace_start"() <{level = 10 : i32, message = "hqk,hkd->hqd"}> : () -> ()
    %cst_11 = arith.constant dense<0.000000e+00> : vector<4x8x8xf32>
    %56 = tpu.matmul %55, %44, %cst_11 {dimension_numbers = #tpu.dot_dimension_numbers<[2], [1], [1], [2], [0, 0, 0, 1, 1, 2], [0], [0]>} : vector<4x8x8xbf16>, vector<4x8x8xbf16>, vector<4x8x8xf32> -> vector<4x8x8xf32>
    "tpu.trace_stop"() : () -> ()
    %57 = vector.extract_strided_slice %56 {offsets = [0, 0, 0], sizes = [1, 8, 8], strides = [1, 1, 1]} : vector<4x8x8xf32> to vector<1x8x8xf32>
    %58 = vector.shape_cast %57 : vector<1x8x8xf32> to vector<8x8xf32>
    %59 = vector.extract_strided_slice %56 {offsets = [1, 0, 0], sizes = [1, 8, 8], strides = [1, 1, 1]} : vector<4x8x8xf32> to vector<1x8x8xf32>
    %60 = vector.shape_cast %59 : vector<1x8x8xf32> to vector<8x8xf32>
    %61 = vector.extract_strided_slice %56 {offsets = [2, 0, 0], sizes = [1, 8, 8], strides = [1, 1, 1]} : vector<4x8x8xf32> to vector<1x8x8xf32>
    %62 = vector.shape_cast %61 : vector<1x8x8xf32> to vector<8x8xf32>
    %63 = vector.extract_strided_slice %56 {offsets = [3, 0, 0], sizes = [1, 8, 8], strides = [1, 1, 1]} : vector<4x8x8xf32> to vector<1x8x8xf32>
    %64 = vector.shape_cast %63 : vector<1x8x8xf32> to vector<8x8xf32>
    %65 = tpu.concatenate %58, %60, %62, %64 in 1 : vector<8x8xf32>, vector<8x8xf32>, vector<8x8xf32>, vector<8x8xf32> -> vector<8x32xf32>
    %66 = arith.truncf %65 : vector<8x32xf32> to vector<8x32xbf16>
    %c0_12 = arith.constant 0 : index
    %c0_13 = arith.constant 0 : index
    %c0_14 = arith.constant 0 : index
    %67 = vector.load %arg5[%c0_12, %c0_13, %c0_14] : memref<1x32x32xbf16, #tpu.memory_space<vmem>>, vector<1x32x32xbf16>
    %68 = vector.shape_cast %67 : vector<1x32x32xbf16> to vector<32x32xbf16>
    %cst_15 = arith.constant dense<0.000000e+00> : vector<8x32xf32>
    %69 = tpu.matmul %66, %68, %cst_15 {dimension_numbers = #tpu.dot_dimension_numbers<[1], [0], [0], [1], [0, 0, 1, 1], [], []>} : vector<8x32xbf16>, vector<32x32xbf16>, vector<8x32xf32> -> vector<8x32xf32>
    %c0_16 = arith.constant 0 : index
    %c0_17 = arith.constant 0 : index
    %c0_18 = arith.constant 0 : index
    %70 = vector.load %arg6[%c0_16, %c0_17, %c0_18] : memref<1x1x32xf32, #tpu.memory_space<vmem>>, vector<1x1x32xf32>
    %71 = vector.shape_cast %70 : vector<1x1x32xf32> to vector<1x32xf32>
    %72 = vector.broadcast %71 : vector<1x32xf32> to vector<8x32xf32>
    %73 = arith.addf %69, %72 : vector<8x32xf32>
    %74 = arith.addf %3, %73 : vector<8x32xf32>
    %c0_19 = arith.constant 0 : index
    %c0_20 = arith.constant 0 : index
    %c0_21 = arith.constant 0 : index
    %75 = vector.load %arg7[%c0_19, %c0_20, %c0_21] : memref<1x1x32xf32, #tpu.memory_space<vmem>>, vector<1x1x32xf32>
    %76 = vector.shape_cast %75 : vector<1x1x32xf32> to vector<1x32xf32>
    %c0_22 = arith.constant 0 : index
    %c0_23 = arith.constant 0 : index
    %c0_24 = arith.constant 0 : index
    %77 = vector.load %arg8[%c0_22, %c0_23, %c0_24] : memref<1x1x32xf32, #tpu.memory_space<vmem>>, vector<1x1x32xf32>
    %78 = vector.shape_cast %77 : vector<1x1x32xf32> to vector<1x32xf32>
    %cst_25 = arith.constant dense<0.000000e+00> : vector<8xf32>
    %79 = vector.multi_reduction <add>, %74, %cst_25 [1] : vector<8x32xf32> to vector<8xf32>
    %80 = vector.shape_cast %79 : vector<8xf32> to vector<8x1xf32>
    %cst_26 = arith.constant 3.200000e+01 : f32
    %81 = vector.broadcast %cst_26 : f32 to vector<8x1xf32>
    %82 = arith.divf %80, %81 : vector<8x1xf32>
    %83 = vector.broadcast %82 : vector<8x1xf32> to vector<8x32xf32>
    %84 = arith.subf %74, %83 : vector<8x32xf32>
    %85 = arith.mulf %84, %84 : vector<8x32xf32>
    %cst_27 = arith.constant dense<0.000000e+00> : vector<8xf32>
    %86 = vector.multi_reduction <add>, %85, %cst_27 [1] : vector<8x32xf32> to vector<8xf32>
    %87 = vector.shape_cast %86 : vector<8xf32> to vector<8x1xf32>
    %cst_28 = arith.constant 3.200000e+01 : f32
    %88 = vector.broadcast %cst_28 : f32 to vector<8x1xf32>
    %89 = arith.divf %87, %88 : vector<8x1xf32>
    %90 = vector.broadcast %82 : vector<8x1xf32> to vector<8x32xf32>
    %91 = arith.subf %74, %90 : vector<8x32xf32>
    %cst_29 = arith.constant 9.99999974E-6 : f32
    %92 = vector.broadcast %cst_29 : f32 to vector<8x1xf32>
    %93 = arith.addf %89, %92 : vector<8x1xf32>
    %94 = math.rsqrt %93 : vector<8x1xf32>
    %95 = vector.broadcast %94 : vector<8x1xf32> to vector<8x32xf32>
    %96 = arith.mulf %91, %95 : vector<8x32xf32>
    %97 = vector.broadcast %76 : vector<1x32xf32> to vector<8x32xf32>
    %98 = arith.mulf %96, %97 : vector<8x32xf32>
    %99 = vector.broadcast %78 : vector<1x32xf32> to vector<8x32xf32>
    %100 = arith.addf %98, %99 : vector<8x32xf32>
    %101 = arith.truncf %100 : vector<8x32xf32> to vector<8x32xbf16>
    %c0_30 = arith.constant 0 : index
    %c0_31 = arith.constant 0 : index
    %c0_32 = arith.constant 0 : index
    %102 = vector.load %arg9[%c0_30, %c0_31, %c0_32] : memref<1x32x64xbf16, #tpu.memory_space<vmem>>, vector<1x32x64xbf16>
    %103 = vector.shape_cast %102 : vector<1x32x64xbf16> to vector<32x64xbf16>
    %cst_33 = arith.constant dense<0.000000e+00> : vector<8x64xf32>
    %104 = tpu.matmul %101, %103, %cst_33 {dimension_numbers = #tpu.dot_dimension_numbers<[1], [0], [0], [1], [0, 0, 1, 1], [], []>} : vector<8x32xbf16>, vector<32x64xbf16>, vector<8x64xf32> -> vector<8x64xf32>
    %c0_34 = arith.constant 0 : index
    %c0_35 = arith.constant 0 : index
    %c0_36 = arith.constant 0 : index
    %105 = vector.load %arg10[%c0_34, %c0_35, %c0_36] : memref<1x1x64xf32, #tpu.memory_space<vmem>>, vector<1x1x64xf32>
    %106 = vector.shape_cast %105 : vector<1x1x64xf32> to vector<1x64xf32>
    %107 = vector.broadcast %106 : vector<1x64xf32> to vector<8x64xf32>
    %108 = arith.addf %104, %107 : vector<8x64xf32>
    %cst_37 = arith.constant 0.000000e+00 : f32
    %109 = vector.broadcast %cst_37 : f32 to vector<8x64xf32>
    %110 = arith.maximumf %108, %109 : vector<8x64xf32>
    %111 = arith.truncf %110 : vector<8x64xf32> to vector<8x64xbf16>
    %c0_38 = arith.constant 0 : index
    %c0_39 = arith.constant 0 : index
    %c0_40 = arith.constant 0 : index
    %112 = vector.load %arg11[%c0_38, %c0_39, %c0_40] : memref<1x64x32xbf16, #tpu.memory_space<vmem>>, vector<1x64x32xbf16>
    %113 = vector.shape_cast %112 : vector<1x64x32xbf16> to vector<64x32xbf16>
    %cst_41 = arith.constant dense<0.000000e+00> : vector<8x32xf32>
    %114 = tpu.matmul %111, %113, %cst_41 {dimension_numbers = #tpu.dot_dimension_numbers<[1], [0], [0], [1], [0, 0, 1, 1], [], []>} : vector<8x64xbf16>, vector<64x32xbf16>, vector<8x32xf32> -> vector<8x32xf32>
    %c0_42 = arith.constant 0 : index
    %c0_43 = arith.constant 0 : index
    %c0_44 = arith.constant 0 : index
    %115 = vector.load %arg12[%c0_42, %c0_43, %c0_44] : memref<1x1x32xf32, #tpu.memory_space<vmem>>, vector<1x1x32xf32>
    %116 = vector.shape_cast %115 : vector<1x1x32xf32> to vector<1x32xf32>
    %117 = vector.broadcast %116 : vector<1x32xf32> to vector<8x32xf32>
    %118 = arith.addf %114, %117 : vector<8x32xf32>
    %119 = arith.addf %100, %118 : vector<8x32xf32>
    %c0_45 = arith.constant 0 : index
    %c0_46 = arith.constant 0 : index
    %c0_47 = arith.constant 0 : index
    %120 = vector.load %arg13[%c0_45, %c0_46, %c0_47] : memref<1x1x32xf32, #tpu.memory_space<vmem>>, vector<1x1x32xf32>
    %121 = vector.shape_cast %120 : vector<1x1x32xf32> to vector<1x32xf32>
    %c0_48 = arith.constant 0 : index
    %c0_49 = arith.constant 0 : index
    %c0_50 = arith.constant 0 : index
    %122 = vector.load %arg14[%c0_48, %c0_49, %c0_50] : memref<1x1x32xf32, #tpu.memory_space<vmem>>, vector<1x1x32xf32>
    %123 = vector.shape_cast %122 : vector<1x1x32xf32> to vector<1x32xf32>
    %cst_51 = arith.constant dense<0.000000e+00> : vector<8xf32>
    %124 = vector.multi_reduction <add>, %119, %cst_51 [1] : vector<8x32xf32> to vector<8xf32>
    %125 = vector.shape_cast %124 : vector<8xf32> to vector<8x1xf32>
    %cst_52 = arith.constant 3.200000e+01 : f32
    %126 = vector.broadcast %cst_52 : f32 to vector<8x1xf32>
    %127 = arith.divf %125, %126 : vector<8x1xf32>
    %128 = vector.broadcast %127 : vector<8x1xf32> to vector<8x32xf32>
    %129 = arith.subf %119, %128 : vector<8x32xf32>
    %130 = arith.mulf %129, %129 : vector<8x32xf32>
    %cst_53 = arith.constant dense<0.000000e+00> : vector<8xf32>
    %131 = vector.multi_reduction <add>, %130, %cst_53 [1] : vector<8x32xf32> to vector<8xf32>
    %132 = vector.shape_cast %131 : vector<8xf32> to vector<8x1xf32>
    %cst_54 = arith.constant 3.200000e+01 : f32
    %133 = vector.broadcast %cst_54 : f32 to vector<8x1xf32>
    %134 = arith.divf %132, %133 : vector<8x1xf32>
    %135 = vector.broadcast %127 : vector<8x1xf32> to vector<8x32xf32>
    %136 = arith.subf %119, %135 : vector<8x32xf32>
    %cst_55 = arith.constant 9.99999974E-6 : f32
    %137 = vector.broadcast %cst_55 : f32 to vector<8x1xf32>
    %138 = arith.addf %134, %137 : vector<8x1xf32>
    %139 = math.rsqrt %138 : vector<8x1xf32>
    %140 = vector.broadcast %139 : vector<8x1xf32> to vector<8x32xf32>
    %141 = arith.mulf %136, %140 : vector<8x32xf32>
    %142 = vector.broadcast %121 : vector<1x32xf32> to vector<8x32xf32>
    %143 = arith.mulf %141, %142 : vector<8x32xf32>
    %144 = vector.broadcast %123 : vector<1x32xf32> to vector<8x32xf32>
    %145 = arith.addf %143, %144 : vector<8x32xf32>
    %c1_i32 = arith.constant 1 : i32
    %146 = arith.cmpi slt, %arg1, %c1_i32 : i32
    %147 = arith.extui %146 : i1 to i32
    %c0_i32_56 = arith.constant 0 : i32
    %148 = arith.cmpi ne, %147, %c0_i32_56 : i32
    scf.if %148 {
      %c0_59 = arith.constant 0 : index
      %c0_60 = arith.constant 0 : index
      %152 = vector.load %arg17[%c0_59, %c0_60] : memref<8x32xf32, #tpu.memory_space<vmem>>, vector<8x32xf32>
      tpu.vector_store %arg17[%c0_59, %c0_60], %145 {strides = array<i32>} : memref<8x32xf32, #tpu.memory_space<vmem>>, vector<8x32xf32>,
    } else {
    }
    %c1_i32_57 = arith.constant 1 : i32
    %149 = arith.cmpi eq, %arg1, %c1_i32_57 : i32
    %150 = arith.extui %149 : i1 to i32
    %c0_i32_58 = arith.constant 0 : i32
    %151 = arith.cmpi ne, %150, %c0_i32_58 : i32
    scf.if %151 {
      %c0_59 = arith.constant 0 : index
      %c0_60 = arith.constant 0 : index
      %152 = vector.load %arg15[%c0_59, %c0_60] : memref<1x32xf32, #tpu.memory_space<vmem>>, vector<1x32xf32>
      %c0_61 = arith.constant 0 : index
      %c0_62 = arith.constant 0 : index
      %153 = vector.load %arg16[%c0_61, %c0_62] : memref<1x32xf32, #tpu.memory_space<vmem>>, vector<1x32xf32>
      %cst_63 = arith.constant dense<0.000000e+00> : vector<8xf32>
      %154 = vector.multi_reduction <add>, %145, %cst_63 [1] : vector<8x32xf32> to vector<8xf32>
      %155 = vector.shape_cast %154 : vector<8xf32> to vector<8x1xf32>
      %cst_64 = arith.constant 3.200000e+01 : f32
      %156 = vector.broadcast %cst_64 : f32 to vector<8x1xf32>
      %157 = arith.divf %155, %156 : vector<8x1xf32>
      %158 = vector.broadcast %157 : vector<8x1xf32> to vector<8x32xf32>
      %159 = arith.subf %145, %158 : vector<8x32xf32>
      %160 = arith.mulf %159, %159 : vector<8x32xf32>
      %cst_65 = arith.constant dense<0.000000e+00> : vector<8xf32>
      %161 = vector.multi_reduction <add>, %160, %cst_65 [1] : vector<8x32xf32> to vector<8xf32>
      %162 = vector.shape_cast %161 : vector<8xf32> to vector<8x1xf32>
      %cst_66 = arith.constant 3.200000e+01 : f32
      %163 = vector.broadcast %cst_66 : f32 to vector<8x1xf32>
      %164 = arith.divf %162, %163 : vector<8x1xf32>
      %165 = vector.broadcast %157 : vector<8x1xf32> to vector<8x32xf32>
      %166 = arith.subf %145, %165 : vector<8x32xf32>
      %cst_67 = arith.constant 9.99999974E-6 : f32
      %167 = vector.broadcast %cst_67 : f32 to vector<8x1xf32>
      %168 = arith.addf %164, %167 : vector<8x1xf32>
      %169 = math.rsqrt %168 : vector<8x1xf32>
      %170 = vector.broadcast %169 : vector<8x1xf32> to vector<8x32xf32>
      %171 = arith.mulf %166, %170 : vector<8x32xf32>
      %172 = vector.broadcast %152 : vector<1x32xf32> to vector<8x32xf32>
      %173 = arith.mulf %171, %172 : vector<8x32xf32>
      %174 = vector.broadcast %153 : vector<1x32xf32> to vector<8x32xf32>
      %175 = arith.addf %173, %174 : vector<8x32xf32>
      %c0_68 = arith.constant 0 : index
      %c0_69 = arith.constant 0 : index
      %176 = vector.load %arg17[%c0_68, %c0_69] : memref<8x32xf32, #tpu.memory_space<vmem>>, vector<8x32xf32>
      tpu.vector_store %arg17[%c0_68, %c0_69], %175 {strides = array<i32>} : memref<8x32xf32, #tpu.memory_space<vmem>>, vector<8x32xf32>,
    } else {
    }
    return
  }
  func.func @transform_0(%arg0: i32, %arg1: i32) -> (i32, i32) {
    %c0_i32 = arith.constant 0 : i32
    %c0_i32_0 = arith.constant 0 : i32
    return %arg0, %c0_i32 : i32, i32
  }
  func.func @transform_1(%arg0: i32, %arg1: i32) -> (i32, i32, i32) {
    %c0_i32 = arith.constant 0 : i32
    %c0_i32_0 = arith.constant 0 : i32
    %c0_i32_1 = arith.constant 0 : i32
    return %arg1, %c0_i32, %c0_i32_0 : i32, i32, i32
  }
  func.func @transform_2(%arg0: i32, %arg1: i32) -> (i32, i32, i32) {
    %c0_i32 = arith.constant 0 : i32
    %c0_i32_0 = arith.constant 0 : i32
    %c0_i32_1 = arith.constant 0 : i32
    return %arg1, %c0_i32, %c0_i32_0 : i32, i32, i32
  }
  func.func @transform_3(%arg0: i32, %arg1: i32) -> (i32, i32, i32) {
    %c0_i32 = arith.constant 0 : i32
    %c0_i32_0 = arith.constant 0 : i32
    %c0_i32_1 = arith.constant 0 : i32
    return %arg1, %c0_i32, %c0_i32_0 : i32, i32, i32
  }
  func.func @transform_4(%arg0: i32, %arg1: i32) -> (i32, i32, i32) {
    %c0_i32 = arith.constant 0 : i32
    %c0_i32_0 = arith.constant 0 : i32
    %c0_i32_1 = arith.constant 0 : i32
    return %arg1, %c0_i32, %c0_i32_0 : i32, i32, i32
  }
  func.func @transform_5(%arg0: i32, %arg1: i32) -> (i32, i32, i32) {
    %c0_i32 = arith.constant 0 : i32
    %c0_i32_0 = arith.constant 0 : i32
    %c0_i32_1 = arith.constant 0 : i32
    return %arg1, %c0_i32, %c0_i32_0 : i32, i32, i32
  }
  func.func @transform_6(%arg0: i32, %arg1: i32) -> (i32, i32, i32) {
    %c0_i32 = arith.constant 0 : i32
    %c0_i32_0 = arith.constant 0 : i32
    %c0_i32_1 = arith.constant 0 : i32
    return %arg1, %c0_i32, %c0_i32_0 : i32, i32, i32
  }
  func.func @transform_7(%arg0: i32, %arg1: i32) -> (i32, i32, i32) {
    %c0_i32 = arith.constant 0 : i32
    %c0_i32_0 = arith.constant 0 : i32
    %c0_i32_1 = arith.constant 0 : i32
    return %arg1, %c0_i32, %c0_i32_0 : i32, i32, i32
  }
  func.func @transform_8(%arg0: i32, %arg1: i32) -> (i32, i32, i32) {
    %c0_i32 = arith.constant 0 : i32
    %c0_i32_0 = arith.constant 0 : i32
    %c0_i32_1 = arith.constant 0 : i32
    return %arg1, %c0_i32, %c0_i32_0 : i32, i32, i32
  }
  func.func @transform_9(%arg0: i32, %arg1: i32) -> (i32, i32, i32) {
    %c0_i32 = arith.constant 0 : i32
    %c0_i32_0 = arith.constant 0 : i32
    %c0_i32_1 = arith.constant 0 : i32
    return %arg1, %c0_i32, %c0_i32_0 : i32, i32, i32
  }
  func.func @transform_10(%arg0: i32, %arg1: i32) -> (i32, i32, i32) {
    %c0_i32 = arith.constant 0 : i32
    %c0_i32_0 = arith.constant 0 : i32
    %c0_i32_1 = arith.constant 0 : i32
    return %arg1, %c0_i32, %c0_i32_0 : i32, i32, i32
  }
  func.func @transform_11(%arg0: i32, %arg1: i32) -> (i32, i32, i32) {
    %c0_i32 = arith.constant 0 : i32
    %c0_i32_0 = arith.constant 0 : i32
    %c0_i32_1 = arith.constant 0 : i32
    return %arg1, %c0_i32, %c0_i32_0 : i32, i32, i32
  }
  func.func @transform_12(%arg0: i32, %arg1: i32) -> (i32, i32, i32) {
    %c0_i32 = arith.constant 0 : i32
    %c0_i32_0 = arith.constant 0 : i32
    %c0_i32_1 = arith.constant 0 : i32
    return %arg1, %c0_i32, %c0_i32_0 : i32, i32, i32
  }
  func.func @transform_13(%arg0: i32, %arg1: i32) -> (i32, i32) {
    %c0_i32 = arith.constant 0 : i32
    %c0_i32_0 = arith.constant 0 : i32
    %c0_i32_1 = arith.constant 0 : i32
    return %c0_i32, %c0_i32_0 : i32, i32
  }
  func.func @transform_14(%arg0: i32, %arg1: i32) -> (i32, i32) {
    %c0_i32 = arith.constant 0 : i32
    %c0_i32_0 = arith.constant 0 : i32
    %c0_i32_1 = arith.constant 0 : i32
    return %c0_i32, %c0_i32_0 : i32, i32
  }
  func.func @transform_15(%arg0: i32, %arg1: i32) -> (i32, i32) {
    %c0_i32 = arith.constant 0 : i32
    %c0_i32_0 = arith.constant 0 : i32
    return %arg0, %c0_i32 : i32, i32
  }
}

</mosaic_0001>

<llo_original>
// kernel: transformer_encoder.1
$region0: #{transformer_encoder.1}
  #allocation0 [shape = 'u32[]', space=smem, size = 0x4, offset = 0x4, fixed_abs, tag = 'smem constant byte address 0x4 - core index']
  #allocation1 [shape = 'u32[144,128]{1,0:T(1,128)}', space=vmem, size = 0x12000, scoped, tag = 'internal scratch']
  %s0 = inlined_call_operand.vmem [shape: f32[16,32], index: 0, kind: input, shape index: {}]
  %s1 = inlined_call_operand.vmem [shape: bf16[2,32,96], index: 1, kind: input, shape index: {}]
  %s2 = inlined_call_operand.vmem [shape: f32[2,1,96], index: 2, kind: input, shape index: {}]
  %s3 = inlined_call_operand.vmem [shape: bf16[2,32,32], index: 3, kind: input, shape index: {}]
  %s4 = inlined_call_operand.vmem [shape: f32[2,1,32], index: 4, kind: input, shape index: {}]
  %s5 = inlined_call_operand.vmem [shape: f32[2,1,32], index: 5, kind: input, shape index: {}]
  %s6 = inlined_call_operand.vmem [shape: f32[2,1,32], index: 6, kind: input, shape index: {}]
  %s7 = inlined_call_operand.vmem [shape: bf16[2,32,64], index: 7, kind: input, shape index: {}]
  %s8 = inlined_call_operand.vmem [shape: f32[2,1,64], index: 8, kind: input, shape index: {}]
  %s9 = inlined_call_operand.vmem [shape: bf16[2,64,32], index: 9, kind: input, shape index: {}]
  %s10 = inlined_call_operand.vmem [shape: f32[2,1,32], index: 10, kind: input, shape index: {}]
  %s11 = inlined_call_operand.vmem [shape: f32[2,1,32], index: 11, kind: input, shape index: {}]
  %s12 = inlined_call_operand.vmem [shape: f32[2,1,32], index: 12, kind: input, shape index: {}]
  %s13 = inlined_call_operand.vmem [shape: f32[1,32], index: 13, kind: input, shape index: {}]
  %s14 = inlined_call_operand.vmem [shape: f32[1,32], index: 14, kind: input, shape index: {}]
  %s15 = inlined_call_operand.hbm [shape: f32[16,32], index: 15, kind: output, shape index: {}]
  %s16 = sld [smem:[#allocation0]]
  $region105: #{transformer_encoder.1} parent=0
    _
  %s18 = ssub.s32 1, %s16
  %s19 = scalar_select 0, %s18, %s16
  $region1: #{transformer_encoder.1} parent=0
    #allocation2 [shape = 'u8[8192]{0}', space=vmem, size = 0x2000, scoped, tag = 'output window, operand 0']
    #allocation3 [shape = 's32[2]{0}', space=sflag, size = 0x8, scoped, tag = 'scoped memory for transformer_encoder.1']
    %20 = vsyncpa [#allocation3], 0
    %s21 = scalar_lea.sflag [#allocation3], 1
    %22 = vsyncpa %s21, 0
    loop: start=0, step=1, limit=6
    $region2: #{transformer_encoder.1} parent=1 // loop_pre_header
      _
    $region3: #{transformer_encoder.1} parent=1 // loop_header
      %s24 = sphi 0, %s28
      %p25 = scmp.ge.s32.totalorder %s24, 6
      %s31 = sphi 0, %s43
      %s32 = sphi 0, %s39
      %s33 = sphi 0, %s31
      %s34 = sphi 0, %s32
      %s35 = sphi 0, %s33
      %s36 = sphi 0, %s34
      %s46 = sphi 0, %s48
      %s49 = sphi 0, %s46
      %s50 = sphi 0, %s49
      %s66 = sphi 0, %s50
      %s72 = sphi 0, %s74
      %s75 = sphi 0, %s72
      %s76 = sphi 0, %s75
      %s92 = sphi 0, %s76
      %s98 = sphi 0, %s100
      %s101 = sphi 0, %s98
      %s102 = sphi 0, %s101
      %s118 = sphi 0, %s102
      %s124 = sphi 0, %s126
      %s127 = sphi 0, %s124
      %s128 = sphi 0, %s127
      %s144 = sphi 0, %s128
      %s150 = sphi 0, %s152
      %s153 = sphi 0, %s150
      %s154 = sphi 0, %s153
      %s170 = sphi 0, %s154
      %s176 = sphi 0, %s178
      %s179 = sphi 0, %s176
      %s180 = sphi 0, %s179
      %s196 = sphi 0, %s180
      %s202 = sphi 0, %s204
      %s205 = sphi 0, %s202
      %s206 = sphi 0, %s205
      %s222 = sphi 0, %s206
      %s228 = sphi 0, %s230
      %s231 = sphi 0, %s228
      %s232 = sphi 0, %s231
      %s248 = sphi 0, %s232
      %s254 = sphi 0, %s256
      %s257 = sphi 0, %s254
      %s258 = sphi 0, %s257
      %s274 = sphi 0, %s258
      %s280 = sphi 0, %s282
      %s283 = sphi 0, %s280
      %s284 = sphi 0, %s283
      %s300 = sphi 0, %s284
      %s306 = sphi 0, %s308
      %s309 = sphi 0, %s306
      %s310 = sphi 0, %s309
      %s326 = sphi 0, %s310
      %s332 = sphi 0, %s334
      %s335 = sphi 0, %s332
      %s336 = sphi 0, %s335
      %s352 = sphi 0, %s336
      %s358 = sphi 0, %s360
      %s361 = sphi 0, %s358
      %s362 = sphi 0, %s361
      %s378 = sphi 0, %s362
      %s382 = sphi 0, %s382
      %s384 = sphi 0, %s382
      %s385 = sphi 0, %s384
      %s399 = sphi 0, %s385
      %s403 = sphi 0, %s403
      %s405 = sphi 0, %s403
      %s406 = sphi 0, %s405
      %s420 = sphi 0, %s406
      %s426 = sphi 0, %s428
      %s429 = sphi 0, %s426
      %s430 = sphi 0, %s429
      %s446 = sphi 0, %s430
    $region4: #{transformer_encoder.1} parent=1 // loop_header_branch
      %27 = sbr.rel (%p25) target = $region8
    $region5: #{transformer_encoder.1} parent=1 // loop_body
      %s29 = ssub.s32 %s24, 1
      %s30 = ssub.s32 %s24, 2
      %s37 = sadd.s32 1, %s32
      %p38 = scmp.ge.s32.totalorder %s37, 2
      %s39 = scalar_select %p38, 0, %s37
      %s40 = sadd.s32 1, %s31
      %s41 = scalar_select %p38, %s40, %s31
      %p42 = scmp.ge.s32.totalorder %s41, 2
      %s43 = scalar_select %p42, 0, %s41
      %s44 = ssub.s32 %s31, %s43
      %p45 = scmp.eq.s32.totalorder %s44, 0
      %s47 = sadd.s32 %s46, 1
      %s48 = scalar_select %p45, %s46, %s47
      %p51 = pneg %p45
      %p52 = scmp.eq.s32.totalorder %s24, 3
      %p53 = por %p51, %p52
      %p54 = scmp.ne.s32.totalorder %s46, %s49
      %p55 = scmp.eq.s32.totalorder %s24, 0
      %p56 = por %p54, %p55
      %p57 = scmp.ne.s32.totalorder %s46, %s49
      %p58 = scmp.eq.s32.totalorder %s29, 3
      %p59 = por %p57, %p58
      %p60 = scmp.ne.s32.totalorder %s49, %s50
      %p61 = scmp.eq.s32.totalorder %s29, 0
      %p62 = por %p60, %p61
      %p63 = scmp.ne.s32.totalorder %s49, %s50
      %p64 = scmp.eq.s32.totalorder %s30, 3
      %p65 = por %p63, %p64
      %p67 = scmp.ne.s32.totalorder %s50, %s66
      %p68 = scmp.eq.s32.totalorder %s30, 0
      %p69 = por %p67, %p68
      %s70 = ssub.s32 %s32, %s39
      %p71 = scmp.eq.s32.totalorder %s70, 0
      %s73 = sadd.s32 %s72, 1
      %s74 = scalar_select %p71, %s72, %s73
      %p77 = pneg %p71
      %p78 = scmp.eq.s32.totalorder %s24, 3
      %p79 = por %p77, %p78
      %p80 = scmp.ne.s32.totalorder %s72, %s75
      %p81 = scmp.eq.s32.totalorder %s24, 0
      %p82 = por %p80, %p81
      %p83 = scmp.ne.s32.totalorder %s72, %s75
      %p84 = scmp.eq.s32.totalorder %s29, 3
      %p85 = por %p83, %p84
      %p86 = scmp.ne.s32.totalorder %s75, %s76
      %p87 = scmp.eq.s32.totalorder %s29, 0
      %p88 = por %p86, %p87
      %p89 = scmp.ne.s32.totalorder %s75, %s76
      %p90 = scmp.eq.s32.totalorder %s30, 3
      %p91 = por %p89, %p90
      %p93 = scmp.ne.s32.totalorder %s76, %s92
      %p94 = scmp.eq.s32.totalorder %s30, 0
      %p95 = por %p93, %p94
      %s96 = ssub.s32 %s32, %s39
      %p97 = scmp.eq.s32.totalorder %s96, 0
      %s99 = sadd.s32 %s98, 1
      %s100 = scalar_select %p97, %s98, %s99
      %p103 = pneg %p97
      %p104 = scmp.eq.s32.totalorder %s24, 3
      %p105 = por %p103, %p104
      %p106 = scmp.ne.s32.totalorder %s98, %s101
      %p107 = scmp.eq.s32.totalorder %s24, 0
      %p108 = por %p106, %p107
      %p109 = scmp.ne.s32.totalorder %s98, %s101
      %p110 = scmp.eq.s32.totalorder %s29, 3
      %p111 = por %p109, %p110
      %p112 = scmp.ne.s32.totalorder %s101, %s102
      %p113 = scmp.eq.s32.totalorder %s29, 0
      %p114 = por %p112, %p113
      %p115 = scmp.ne.s32.totalorder %s101, %s102
      %p116 = scmp.eq.s32.totalorder %s30, 3
      %p117 = por %p115, %p116
      %p119 = scmp.ne.s32.totalorder %s102, %s118
      %p120 = scmp.eq.s32.totalorder %s30, 0
      %p121 = por %p119, %p120
      %s122 = ssub.s32 %s32, %s39
      %p123 = scmp.eq.s32.totalorder %s122, 0
      %s125 = sadd.s32 %s124, 1
      %s126 = scalar_select %p123, %s124, %s125
      %p129 = pneg %p123
      %p130 = scmp.eq.s32.totalorder %s24, 3
      %p131 = por %p129, %p130
      %p132 = scmp.ne.s32.totalorder %s124, %s127
      %p133 = scmp.eq.s32.totalorder %s24, 0
      %p134 = por %p132, %p133
      %p135 = scmp.ne.s32.totalorder %s124, %s127
      %p136 = scmp.eq.s32.totalorder %s29, 3
      %p137 = por %p135, %p136
      %p138 = scmp.ne.s32.totalorder %s127, %s128
      %p139 = scmp.eq.s32.totalorder %s29, 0
      %p140 = por %p138, %p139
      %p141 = scmp.ne.s32.totalorder %s127, %s128
      %p142 = scmp.eq.s32.totalorder %s30, 3
      %p143 = por %p141, %p142
      %p145 = scmp.ne.s32.totalorder %s128, %s144
      %p146 = scmp.eq.s32.totalorder %s30, 0
      %p147 = por %p145, %p146
      %s148 = ssub.s32 %s32, %s39
      %p149 = scmp.eq.s32.totalorder %s148, 0
      %s151 = sadd.s32 %s150, 1
      %s152 = scalar_select %p149, %s150, %s151
      %p155 = pneg %p149
      %p156 = scmp.eq.s32.totalorder %s24, 3
      %p157 = por %p155, %p156
      %p158 = scmp.ne.s32.totalorder %s150, %s153
      %p159 = scmp.eq.s32.totalorder %s24, 0
      %p160 = por %p158, %p159
      %p161 = scmp.ne.s32.totalorder %s150, %s153
      %p162 = scmp.eq.s32.totalorder %s29, 3
      %p163 = por %p161, %p162
      %p164 = scmp.ne.s32.totalorder %s153, %s154
      %p165 = scmp.eq.s32.totalorder %s29, 0
      %p166 = por %p164, %p165
      %p167 = scmp.ne.s32.totalorder %s153, %s154
      %p168 = scmp.eq.s32.totalorder %s30, 3
      %p169 = por %p167, %p168
      %p171 = scmp.ne.s32.totalorder %s154, %s170
      %p172 = scmp.eq.s32.totalorder %s30, 0
      %p173 = por %p171, %p172
      %s174 = ssub.s32 %s32, %s39
      %p175 = scmp.eq.s32.totalorder %s174, 0
      %s177 = sadd.s32 %s176, 1
      %s178 = scalar_select %p175, %s176, %s177
      %p181 = pneg %p175
      %p182 = scmp.eq.s32.totalorder %s24, 3
      %p183 = por %p181, %p182
      %p184 = scmp.ne.s32.totalorder %s176, %s179
      %p185 = scmp.eq.s32.totalorder %s24, 0
      %p186 = por %p184, %p185
      %p187 = scmp.ne.s32.totalorder %s176, %s179
      %p188 = scmp.eq.s32.totalorder %s29, 3
      %p189 = por %p187, %p188
      %p190 = scmp.ne.s32.totalorder %s179, %s180
      %p191 = scmp.eq.s32.totalorder %s29, 0
      %p192 = por %p190, %p191
      %p193 = scmp.ne.s32.totalorder %s179, %s180
      %p194 = scmp.eq.s32.totalorder %s30, 3
      %p195 = por %p193, %p194
      %p197 = scmp.ne.s32.totalorder %s180, %s196
      %p198 = scmp.eq.s32.totalorder %s30, 0
      %p199 = por %p197, %p198
      %s200 = ssub.s32 %s32, %s39
      %p201 = scmp.eq.s32.totalorder %s200, 0
      %s203 = sadd.s32 %s202, 1
      %s204 = scalar_select %p201, %s202, %s203
      %p207 = pneg %p201
      %p208 = scmp.eq.s32.totalorder %s24, 3
      %p209 = por %p207, %p208
      %p210 = scmp.ne.s32.totalorder %s202, %s205
      %p211 = scmp.eq.s32.totalorder %s24, 0
      %p212 = por %p210, %p211
      %p213 = scmp.ne.s32.totalorder %s202, %s205
      %p214 = scmp.eq.s32.totalorder %s29, 3
      %p215 = por %p213, %p214
      %p216 = scmp.ne.s32.totalorder %s205, %s206
      %p217 = scmp.eq.s32.totalorder %s29, 0
      %p218 = por %p216, %p217
      %p219 = scmp.ne.s32.totalorder %s205, %s206
      %p220 = scmp.eq.s32.totalorder %s30, 3
      %p221 = por %p219, %p220
      %p223 = scmp.ne.s32.totalorder %s206, %s222
      %p224 = scmp.eq.s32.totalorder %s30, 0
      %p225 = por %p223, %p224
      %s226 = ssub.s32 %s32, %s39
      %p227 = scmp.eq.s32.totalorder %s226, 0
      %s229 = sadd.s32 %s228, 1
      %s230 = scalar_select %p227, %s228, %s229
      %p233 = pneg %p227
      %p234 = scmp.eq.s32.totalorder %s24, 3
      %p235 = por %p233, %p234
      %p236 = scmp.ne.s32.totalorder %s228, %s231
      %p237 = scmp.eq.s32.totalorder %s24, 0
      %p238 = por %p236, %p237
      %p239 = scmp.ne.s32.totalorder %s228, %s231
      %p240 = scmp.eq.s32.totalorder %s29, 3
      %p241 = por %p239, %p240
      %p242 = scmp.ne.s32.totalorder %s231, %s232
      %p243 = scmp.eq.s32.totalorder %s29, 0
      %p244 = por %p242, %p243
      %p245 = scmp.ne.s32.totalorder %s231, %s232
      %p246 = scmp.eq.s32.totalorder %s30, 3
      %p247 = por %p245, %p246
      %p249 = scmp.ne.s32.totalorder %s232, %s248
      %p250 = scmp.eq.s32.totalorder %s30, 0
      %p251 = por %p249, %p250
      %s252 = ssub.s32 %s32, %s39
      %p253 = scmp.eq.s32.totalorder %s252, 0
      %s255 = sadd.s32 %s254, 1
      %s256 = scalar_select %p253, %s254, %s255
      %p259 = pneg %p253
      %p260 = scmp.eq.s32.totalorder %s24, 3
      %p261 = por %p259, %p260
      %p262 = scmp.ne.s32.totalorder %s254, %s257
      %p263 = scmp.eq.s32.totalorder %s24, 0
      %p264 = por %p262, %p263
      %p265 = scmp.ne.s32.totalorder %s254, %s257
      %p266 = scmp.eq.s32.totalorder %s29, 3
      %p267 = por %p265, %p266
      %p268 = scmp.ne.s32.totalorder %s257, %s258
      %p269 = scmp.eq.s32.totalorder %s29, 0
      %p270 = por %p268, %p269
      %p271 = scmp.ne.s32.totalorder %s257, %s258
      %p272 = scmp.eq.s32.totalorder %s30, 3
      %p273 = por %p271, %p272
      %p275 = scmp.ne.s32.totalorder %s258, %s274
      %p276 = scmp.eq.s32.totalorder %s30, 0
      %p277 = por %p275, %p276
      %s278 = ssub.s32 %s32, %s39
      %p279 = scmp.eq.s32.totalorder %s278, 0
      %s281 = sadd.s32 %s280, 1
      %s282 = scalar_select %p279, %s280, %s281
      %p285 = pneg %p279
      %p286 = scmp.eq.s32.totalorder %s24, 3
      %p287 = por %p285, %p286
      %p288 = scmp.ne.s32.totalorder %s280, %s283
      %p289 = scmp.eq.s32.totalorder %s24, 0
      %p290 = por %p288, %p289
      %p291 = scmp.ne.s32.totalorder %s280, %s283
      %p292 = scmp.eq.s32.totalorder %s29, 3
      %p293 = por %p291, %p292
      %p294 = scmp.ne.s32.totalorder %s283, %s284
      %p295 = scmp.eq.s32.totalorder %s29, 0
      %p296 = por %p294, %p295
      %p297 = scmp.ne.s32.totalorder %s283, %s284
      %p298 = scmp.eq.s32.totalorder %s30, 3
      %p299 = por %p297, %p298
      %p301 = scmp.ne.s32.totalorder %s284, %s300
      %p302 = scmp.eq.s32.totalorder %s30, 0
      %p303 = por %p301, %p302
      %s304 = ssub.s32 %s32, %s39
      %p305 = scmp.eq.s32.totalorder %s304, 0
      %s307 = sadd.s32 %s306, 1
      %s308 = scalar_select %p305, %s306, %s307
      %p311 = pneg %p305
      %p312 = scmp.eq.s32.totalorder %s24, 3
      %p313 = por %p311, %p312
      %p314 = scmp.ne.s32.totalorder %s306, %s309
      %p315 = scmp.eq.s32.totalorder %s24, 0
      %p316 = por %p314, %p315
      %p317 = scmp.ne.s32.totalorder %s306, %s309
      %p318 = scmp.eq.s32.totalorder %s29, 3
      %p319 = por %p317, %p318
      %p320 = scmp.ne.s32.totalorder %s309, %s310
      %p321 = scmp.eq.s32.totalorder %s29, 0
      %p322 = por %p320, %p321
      %p323 = scmp.ne.s32.totalorder %s309, %s310
      %p324 = scmp.eq.s32.totalorder %s30, 3
      %p325 = por %p323, %p324
      %p327 = scmp.ne.s32.totalorder %s310, %s326
      %p328 = scmp.eq.s32.totalorder %s30, 0
      %p329 = por %p327, %p328
      %s330 = ssub.s32 %s32, %s39
      %p331 = scmp.eq.s32.totalorder %s330, 0
      %s333 = sadd.s32 %s332, 1
      %s334 = scalar_select %p331, %s332, %s333
      %p337 = pneg %p331
      %p338 = scmp.eq.s32.totalorder %s24, 3
      %p339 = por %p337, %p338
      %p340 = scmp.ne.s32.totalorder %s332, %s335
      %p341 = scmp.eq.s32.totalorder %s24, 0
      %p342 = por %p340, %p341
      %p343 = scmp.ne.s32.totalorder %s332, %s335
      %p344 = scmp.eq.s32.totalorder %s29, 3
      %p345 = por %p343, %p344
      %p346 = scmp.ne.s32.totalorder %s335, %s336
      %p347 = scmp.eq.s32.totalorder %s29, 0
      %p348 = por %p346, %p347
      %p349 = scmp.ne.s32.totalorder %s335, %s336
      %p350 = scmp.eq.s32.totalorder %s30, 3
      %p351 = por %p349, %p350
      %p353 = scmp.ne.s32.totalorder %s336, %s352
      %p354 = scmp.eq.s32.totalorder %s30, 0
      %p355 = por %p353, %p354
      %s356 = ssub.s32 %s32, %s39
      %p357 = scmp.eq.s32.totalorder %s356, 0
      %s359 = sadd.s32 %s358, 1
      %s360 = scalar_select %p357, %s358, %s359
      %p363 = pneg %p357
      %p364 = scmp.eq.s32.totalorder %s24, 3
      %p365 = por %p363, %p364
      %p366 = scmp.ne.s32.totalorder %s358, %s361
      %p367 = scmp.eq.s32.totalorder %s24, 0
      %p368 = por %p366, %p367
      %p369 = scmp.ne.s32.totalorder %s358, %s361
      %p370 = scmp.eq.s32.totalorder %s29, 3
      %p371 = por %p369, %p370
      %p372 = scmp.ne.s32.totalorder %s361, %s362
      %p373 = scmp.eq.s32.totalorder %s29, 0
      %p374 = por %p372, %p373
      %p375 = scmp.ne.s32.totalorder %s361, %s362
      %p376 = scmp.eq.s32.totalorder %s30, 3
      %p377 = por %p375, %p376
      %p379 = scmp.ne.s32.totalorder %s362, %s378
      %p380 = scmp.eq.s32.totalorder %s30, 0
      %p381 = por %p379, %p380
      %s383 = sadd.s32 %s382, 1
      %p386 = scmp.eq.s32.totalorder %s24, 3
      %p387 = scmp.ne.s32.totalorder %s382, %s384
      %p388 = scmp.eq.s32.totalorder %s24, 0
      %p389 = por %p387, %p388
      %p390 = scmp.ne.s32.totalorder %s382, %s384
      %p391 = scmp.eq.s32.totalorder %s29, 3
      %p392 = por %p390, %p391
      %p393 = scmp.ne.s32.totalorder %s384, %s385
      %p394 = scmp.eq.s32.totalorder %s29, 0
      %p395 = por %p393, %p394
      %p396 = scmp.ne.s32.totalorder %s384, %s385
      %p397 = scmp.eq.s32.totalorder %s30, 3
      %p398 = por %p396, %p397
      %p400 = scmp.ne.s32.totalorder %s385, %s399
      %p401 = scmp.eq.s32.totalorder %s30, 0
      %p402 = por %p400, %p401
      %s404 = sadd.s32 %s403, 1
      %p407 = scmp.eq.s32.totalorder %s24, 3
      %p408 = scmp.ne.s32.totalorder %s403, %s405
      %p409 = scmp.eq.s32.totalorder %s24, 0
      %p410 = por %p408, %p409
      %p411 = scmp.ne.s32.totalorder %s403, %s405
      %p412 = scmp.eq.s32.totalorder %s29, 3
      %p413 = por %p411, %p412
      %p414 = scmp.ne.s32.totalorder %s405, %s406
      %p415 = scmp.eq.s32.totalorder %s29, 0
      %p416 = por %p414, %p415
      %p417 = scmp.ne.s32.totalorder %s405, %s406
      %p418 = scmp.eq.s32.totalorder %s30, 3
      %p419 = por %p417, %p418
      %p421 = scmp.ne.s32.totalorder %s406, %s420
      %p422 = scmp.eq.s32.totalorder %s30, 0
      %p423 = por %p421, %p422
      %s424 = ssub.s32 %s31, %s43
      %p425 = scmp.eq.s32.totalorder %s424, 0
      %s427 = sadd.s32 %s426, 1
      %s428 = scalar_select %p425, %s426, %s427
      %p431 = pneg %p425
      %p432 = scmp.eq.s32.totalorder %s24, 3
      %p433 = por %p431, %p432
      %p434 = scmp.ne.s32.totalorder %s426, %s429
      %p435 = scmp.eq.s32.totalorder %s24, 0
      %p436 = por %p434, %p435
      %p437 = scmp.ne.s32.totalorder %s426, %s429
      %p438 = scmp.eq.s32.totalorder %s29, 3
      %p439 = por %p437, %p438
      %p440 = scmp.ne.s32.totalorder %s429, %s430
      %p441 = scmp.eq.s32.totalorder %s29, 0
      %p442 = por %p440, %p441
      %p443 = scmp.ne.s32.totalorder %s429, %s430
      %p444 = scmp.eq.s32.totalorder %s30, 3
      %p445 = por %p443, %p444
      %p447 = scmp.ne.s32.totalorder %s430, %s446
      %p448 = scmp.eq.s32.totalorder %s30, 0
      %p449 = por %p447, %p448
      %p450 = scmp.le.s32.totalorder 1, %s24
      %p451 = scmp.lt.s32.totalorder %s24, 5
      %p452 = pnand %p450, %p451
      %p453 = pneg %p452
      // Predicated region
      $region9: #{transformer_encoder.1} parent=5 // pred_check
        _
      $region10: #{transformer_encoder.1} parent=5 // pred_check_branch
        %455 = sbr.rel (%p452) target = $region12
      $region11: #{transformer_encoder.1} parent=5 // pred_region
        %s456 = ssub.s32 %s24, 1
        // Predicated region
        $region13: #{transformer_encoder.1} parent=11 // pred_check
          %p457 = pneg %p395
        $region14: #{transformer_encoder.1} parent=11 // pred_check_branch
          %459 = sbr.rel (%p457) target = $region16
        $region15: #{transformer_encoder.1} parent=11 // pred_region
          _
        $region16: #{transformer_encoder.1} parent=11 // pred_fallthru
          _
        // Predicated region
        $region17: #{transformer_encoder.1} parent=11 // pred_check
          %p460 = pneg %p416
        $region18: #{transformer_encoder.1} parent=11 // pred_check_branch
          %462 = sbr.rel (%p460) target = $region20
        $region19: #{transformer_encoder.1} parent=11 // pred_region
          _
        $region20: #{transformer_encoder.1} parent=11 // pred_fallthru
          _
      $region12: #{transformer_encoder.1} parent=5 // pred_fallthru
        _
      %p463 = scmp.lt.s32.totalorder %s24, 4
      // Predicated region
      $region21: #{transformer_encoder.1} parent=5 // pred_check
        %p464 = pneg %p463
      $region22: #{transformer_encoder.1} parent=5 // pred_check_branch
        %466 = sbr.rel (%p464) target = $region24
      $region23: #{transformer_encoder.1} parent=5 // pred_region
        // Predicated region
        $region25: #{transformer_encoder.1} parent=23 // pred_check
          %p467 = pneg %p56
        $region26: #{transformer_encoder.1} parent=23 // pred_check_branch
          %469 = sbr.rel (%p467) target = $region28
        $region27: #{transformer_encoder.1} parent=23 // pred_region
          %p470 = scmp.lt.s32.totalorder %s31, 1
          %s471 = scalar_select %p470, %s31, 1
          %s472 = smul.addr %s471, 8
          %s473 = scalar_lea.vmem %s0, %s472
        $region28: #{transformer_encoder.1} parent=23 // pred_fallthru
          _
        // Predicated region
        $region29: #{transformer_encoder.1} parent=23 // pred_check
          %p474 = pneg %p82
        $region30: #{transformer_encoder.1} parent=23 // pred_check_branch
          %476 = sbr.rel (%p474) target = $region32
        $region31: #{transformer_encoder.1} parent=23 // pred_region
          %p477 = scmp.lt.s32.totalorder %s32, 1
          %s478 = scalar_select %p477, %s32, 1
          %s479 = smul.addr %s478, 4
          %s480 = smul.addr %s479, 4
          %s481 = scalar_lea.vmem %s1, %s480
        $region32: #{transformer_encoder.1} parent=23 // pred_fallthru
          _
        // Predicated region
        $region33: #{transformer_encoder.1} parent=23 // pred_check
          %p482 = pneg %p108
        $region34: #{transformer_encoder.1} parent=23 // pred_check_branch
          %484 = sbr.rel (%p482) target = $region36
        $region35: #{transformer_encoder.1} parent=23 // pred_region
          %p485 = scmp.lt.s32.totalorder %s32, 1
          %s486 = scalar_select %p485, %s32, 1
          %s487 = scalar_lea.vmem %s2, %s486
        $region36: #{transformer_encoder.1} parent=23 // pred_fallthru
          _
        // Predicated region
        $region37: #{transformer_encoder.1} parent=23 // pred_check
          %p488 = pneg %p134
        $region38: #{transformer_encoder.1} parent=23 // pred_check_branch
          %490 = sbr.rel (%p488) target = $region40
        $region39: #{transformer_encoder.1} parent=23 // pred_region
          %p491 = scmp.lt.s32.totalorder %s32, 1
          %s492 = scalar_select %p491, %s32, 1
          %s493 = smul.addr %s492, 4
          %s494 = smul.addr %s493, 4
          %s495 = scalar_lea.vmem %s3, %s494
        $region40: #{transformer_encoder.1} parent=23 // pred_fallthru
          _
        // Predicated region
        $region41: #{transformer_encoder.1} parent=23 // pred_check
          %p496 = pneg %p160
        $region42: #{transformer_encoder.1} parent=23 // pred_check_branch
          %498 = sbr.rel (%p496) target = $region44
        $region43: #{transformer_encoder.1} parent=23 // pred_region
          %p499 = scmp.lt.s32.totalorder %s32, 1
          %s500 = scalar_select %p499, %s32, 1
          %s501 = scalar_lea.vmem %s4, %s500
        $region44: #{transformer_encoder.1} parent=23 // pred_fallthru
          _
        // Predicated region
        $region45: #{transformer_encoder.1} parent=23 // pred_check
          %p502 = pneg %p186
        $region46: #{transformer_encoder.1} parent=23 // pred_check_branch
          %504 = sbr.rel (%p502) target = $region48
        $region47: #{transformer_encoder.1} parent=23 // pred_region
          %p505 = scmp.lt.s32.totalorder %s32, 1
          %s506 = scalar_select %p505, %s32, 1
          %s507 = scalar_lea.vmem %s5, %s506
        $region48: #{transformer_encoder.1} parent=23 // pred_fallthru
          _
        // Predicated region
        $region49: #{transformer_encoder.1} parent=23 // pred_check
          %p508 = pneg %p212
        $region50: #{transformer_encoder.1} parent=23 // pred_check_branch
          %510 = sbr.rel (%p508) target = $region52
        $region51: #{transformer_encoder.1} parent=23 // pred_region
          %p511 = scmp.lt.s32.totalorder %s32, 1
          %s512 = scalar_select %p511, %s32, 1
          %s513 = scalar_lea.vmem %s6, %s512
        $region52: #{transformer_encoder.1} parent=23 // pred_fallthru
          _
        // Predicated region
        $region53: #{transformer_encoder.1} parent=23 // pred_check
          %p514 = pneg %p238
        $region54: #{transformer_encoder.1} parent=23 // pred_check_branch
          %516 = sbr.rel (%p514) target = $region56
        $region55: #{transformer_encoder.1} parent=23 // pred_region
          %p517 = scmp.lt.s32.totalorder %s32, 1
          %s518 = scalar_select %p517, %s32, 1
          %s519 = smul.addr %s518, 4
          %s520 = smul.addr %s519, 4
          %s521 = scalar_lea.vmem %s7, %s520
        $region56: #{transformer_encoder.1} parent=23 // pred_fallthru
          _
        // Predicated region
        $region57: #{transformer_encoder.1} parent=23 // pred_check
          %p522 = pneg %p264
        $region58: #{transformer_encoder.1} parent=23 // pred_check_branch
          %524 = sbr.rel (%p522) target = $region60
        $region59: #{transformer_encoder.1} parent=23 // pred_region
          %p525 = scmp.lt.s32.totalorder %s32, 1
          %s526 = scalar_select %p525, %s32, 1
          %s527 = scalar_lea.vmem %s8, %s526
        $region60: #{transformer_encoder.1} parent=23 // pred_fallthru
          _
        // Predicated region
        $region61: #{transformer_encoder.1} parent=23 // pred_check
          %p528 = pneg %p290
        $region62: #{transformer_encoder.1} parent=23 // pred_check_branch
          %530 = sbr.rel (%p528) target = $region64
        $region63: #{transformer_encoder.1} parent=23 // pred_region
          %p531 = scmp.lt.s32.totalorder %s32, 1
          %s532 = scalar_select %p531, %s32, 1
          %s533 = smul.addr %s532, 8
          %s534 = smul.addr %s533, 4
          %s535 = scalar_lea.vmem %s9, %s534
        $region64: #{transformer_encoder.1} parent=23 // pred_fallthru
          _
        // Predicated region
        $region65: #{transformer_encoder.1} parent=23 // pred_check
          %p536 = pneg %p316
        $region66: #{transformer_encoder.1} parent=23 // pred_check_branch
          %538 = sbr.rel (%p536) target = $region68
        $region67: #{transformer_encoder.1} parent=23 // pred_region
          %p539 = scmp.lt.s32.totalorder %s32, 1
          %s540 = scalar_select %p539, %s32, 1
          %s541 = scalar_lea.vmem %s10, %s540
        $region68: #{transformer_encoder.1} parent=23 // pred_fallthru
          _
        // Predicated region
        $region69: #{transformer_encoder.1} parent=23 // pred_check
          %p542 = pneg %p342
        $region70: #{transformer_encoder.1} parent=23 // pred_check_branch
          %544 = sbr.rel (%p542) target = $region72
        $region71: #{transformer_encoder.1} parent=23 // pred_region
          %p545 = scmp.lt.s32.totalorder %s32, 1
          %s546 = scalar_select %p545, %s32, 1
          %s547 = scalar_lea.vmem %s11, %s546
        $region72: #{transformer_encoder.1} parent=23 // pred_fallthru
          _
        // Predicated region
        $region73: #{transformer_encoder.1} parent=23 // pred_check
          %p548 = pneg %p368
        $region74: #{transformer_encoder.1} parent=23 // pred_check_branch
          %550 = sbr.rel (%p548) target = $region76
        $region75: #{transformer_encoder.1} parent=23 // pred_region
          %p551 = scmp.lt.s32.totalorder %s32, 1
          %s552 = scalar_select %p551, %s32, 1
          %s553 = scalar_lea.vmem %s12, %s552
        $region76: #{transformer_encoder.1} parent=23 // pred_fallthru
          _
      $region24: #{transformer_encoder.1} parent=5 // pred_fallthru
        _
      %p554 = scmp.le.s32.totalorder 1, %s24
      %p555 = scmp.lt.s32.totalorder %s24, 5
      %p556 = pnand %p554, %p555
      %p557 = pneg %p556
      // Predicated region
      $region77: #{transformer_encoder.1} parent=5 // pred_check
        _
      $region78: #{transformer_encoder.1} parent=5 // pred_check_branch
        %559 = sbr.rel (%p556) target = $region80
      $region79: #{transformer_encoder.1} parent=5 // pred_region
        %s560 = ssub.s32 %s24, 1
        %p561 = scmp.lt.s32.totalorder %s33, 1
        %s562 = scalar_select %p561, %s33, 1
        %s563 = smul.addr %s562, 8
        %s564 = scalar_lea.vmem %s0, %s563
        %p565 = pneg %p62
        %p566 = pneg %p59
        %p567 = scmp.lt.s32.totalorder %s34, 1
        %s568 = scalar_select %p567, %s34, 1
        %s569 = smul.addr %s568, 4
        %s570 = smul.addr %s569, 4
        %s571 = scalar_lea.vmem %s1, %s570
        %p572 = pneg %p88
        %p573 = pneg %p85
        %p574 = scmp.lt.s32.totalorder %s34, 1
        %s575 = scalar_select %p574, %s34, 1
        %s576 = scalar_lea.vmem %s2, %s575
        %p577 = pneg %p114
        %p578 = pneg %p111
        %p579 = scmp.lt.s32.totalorder %s34, 1
        %s580 = scalar_select %p579, %s34, 1
        %s581 = smul.addr %s580, 4
        %s582 = smul.addr %s581, 4
        %s583 = scalar_lea.vmem %s3, %s582
        %p584 = pneg %p140
        %p585 = pneg %p137
        %p586 = scmp.lt.s32.totalorder %s34, 1
        %s587 = scalar_select %p586, %s34, 1
        %s588 = scalar_lea.vmem %s4, %s587
        %p589 = pneg %p166
        %p590 = pneg %p163
        %p591 = scmp.lt.s32.totalorder %s34, 1
        %s592 = scalar_select %p591, %s34, 1
        %s593 = scalar_lea.vmem %s5, %s592
        %p594 = pneg %p192
        %p595 = pneg %p189
        %p596 = scmp.lt.s32.totalorder %s34, 1
        %s597 = scalar_select %p596, %s34, 1
        %s598 = scalar_lea.vmem %s6, %s597
        %p599 = pneg %p218
        %p600 = pneg %p215
        %p601 = scmp.lt.s32.totalorder %s34, 1
        %s602 = scalar_select %p601, %s34, 1
        %s603 = smul.addr %s602, 4
        %s604 = smul.addr %s603, 4
        %s605 = scalar_lea.vmem %s7, %s604
        %p606 = pneg %p244
        %p607 = pneg %p241
        %p608 = scmp.lt.s32.totalorder %s34, 1
        %s609 = scalar_select %p608, %s34, 1
        %s610 = scalar_lea.vmem %s8, %s609
        %p611 = pneg %p270
        %p612 = pneg %p267
        %p613 = scmp.lt.s32.totalorder %s34, 1
        %s614 = scalar_select %p613, %s34, 1
        %s615 = smul.addr %s614, 8
        %s616 = smul.addr %s615, 4
        %s617 = scalar_lea.vmem %s9, %s616
        %p618 = pneg %p296
        %p619 = pneg %p293
        %p620 = scmp.lt.s32.totalorder %s34, 1
        %s621 = scalar_select %p620, %s34, 1
        %s622 = scalar_lea.vmem %s10, %s621
        %p623 = pneg %p322
        %p624 = pneg %p319
        %p625 = scmp.lt.s32.totalorder %s34, 1
        %s626 = scalar_select %p625, %s34, 1
        %s627 = scalar_lea.vmem %s11, %s626
        %p628 = pneg %p348
        %p629 = pneg %p345
        %p630 = scmp.lt.s32.totalorder %s34, 1
        %s631 = scalar_select %p630, %s34, 1
        %s632 = scalar_lea.vmem %s12, %s631
        %p633 = pneg %p374
        %p634 = pneg %p371
        %p635 = pneg %p395
        %p636 = pneg %p392
        %p637 = pneg %p416
        %p638 = pneg %p413
        %p639 = pneg %p442
        %p640 = pneg %p439
        %s641 = sand.u32 %s429, 1
        %s642 = scalar_lea.sflag [#allocation3], %s641
        %s643 = sand.u32 %s429, 1
        %s644 = smul.addr %s643, 8
        %s645 = scalar_lea.vmem [#allocation2], %s644
        %p646 = scmp.lt.s32.totalorder %s33, 1
        %s647 = scalar_select %p646, %s33, 1
        %s648 = smul.addr %s647, 8
        %s649 = scalar_lea.vmem %s0, %s648
        %p650 = scmp.lt.s32.totalorder %s34, 1
        %s651 = scalar_select %p650, %s34, 1
        %s652 = smul.addr %s651, 4
        %s653 = smul.addr %s652, 4
        %s654 = scalar_lea.vmem %s1, %s653
        %p655 = scmp.lt.s32.totalorder %s34, 1
        %s656 = scalar_select %p655, %s34, 1
        %s657 = scalar_lea.vmem %s2, %s656
        %p658 = scmp.lt.s32.totalorder %s34, 1
        %s659 = scalar_select %p658, %s34, 1
        %s660 = smul.addr %s659, 4
        %s661 = smul.addr %s660, 4
        %s662 = scalar_lea.vmem %s3, %s661
        %p663 = scmp.lt.s32.totalorder %s34, 1
        %s664 = scalar_select %p663, %s34, 1
        %s665 = scalar_lea.vmem %s4, %s664
        %p666 = scmp.lt.s32.totalorder %s34, 1
        %s667 = scalar_select %p666, %s34, 1
        %s668 = scalar_lea.vmem %s5, %s667
        %p669 = scmp.lt.s32.totalorder %s34, 1
        %s670 = scalar_select %p669, %s34, 1
        %s671 = scalar_lea.vmem %s6, %s670
        %p672 = scmp.lt.s32.totalorder %s34, 1
        %s673 = scalar_select %p672, %s34, 1
        %s674 = smul.addr %s673, 4
        %s675 = smul.addr %s674, 4
        %s676 = scalar_lea.vmem %s7, %s675
        %p677 = scmp.lt.s32.totalorder %s34, 1
        %s678 = scalar_select %p677, %s34, 1
        %s679 = scalar_lea.vmem %s8, %s678
        %p680 = scmp.lt.s32.totalorder %s34, 1
        %s681 = scalar_select %p680, %s34, 1
        %s682 = smul.addr %s681, 8
        %s683 = smul.addr %s682, 4
        %s684 = scalar_lea.vmem %s9, %s683
        %p685 = scmp.lt.s32.totalorder %s34, 1
        %s686 = scalar_select %p685, %s34, 1
        %s687 = scalar_lea.vmem %s10, %s686
        %p688 = scmp.lt.s32.totalorder %s34, 1
        %s689 = scalar_select %p688, %s34, 1
        %s690 = scalar_lea.vmem %s11, %s689
        %p691 = scmp.lt.s32.totalorder %s34, 1
        %s692 = scalar_select %p691, %s34, 1
        %s693 = scalar_lea.vmem %s12, %s692
        %p695 = scmp.eq.s32.totalorder %s34, 0
        // Predicated region
        $region81: #{transformer_encoder.1} parent=79 // pred_check
          %p696 = pneg %p695
        $region82: #{transformer_encoder.1} parent=79 // pred_check_branch
          %698 = sbr.rel (%p696) target = $region84
        $region83: #{transformer_encoder.1} parent=79 // pred_region
          %v699 = vld [vmem:[%s649] sm:$0xff]
          %vm700 = vcmask 261120
          %701 = vst.msk [vmem:[%s645] sm:$0xff] %vm700, %v699
        $region84: #{transformer_encoder.1} parent=79 // pred_fallthru
          _
        %v702 = vld [vmem:[%s645] sm:$0xff]
        %v703 = vpack.c.bf16 %v702, %v702
        %v704 = vld [vmem:[%s654] sm:$0xf]
        %v705 = vld [vmem:[%s654 + $0x4] sm:$0xf]
        %v706 = vld [vmem:[%s654 + $0x8] sm:$0xf]
        %v707 = vld [vmem:[%s654 + $0xc] sm:$0xf]
        %v708 = vld [vmem:[%s657] sm:$0x1]
        %v710 = vlaneseq
        %v711 = vshrl.u32 %v710, 7
        %v712 = vsub.s32 0, %v711
        %v713 = vrot.slane %v708, %v712
        %v719 = vunpack.c.l.b16 %v704
        %v720 = vunpack.c.l.b16 %v705
        %v721 = vunpack.c.l.b16 %v706
        %v722 = vunpack.c.l.b16 %v707
        %v723 = vpack.c.b16 %v720, %v719
        %v724 = vpack.c.b16 %v722, %v721
        %vm727 = vcmask 261120
        %v729 = vsel %vm727, %v703, 0
        %731 = vmatprep.subr.bf16.mxu0 0
        %732 = vmatpush1.bf16.msra.mxu0 %v723
        %733 = vmatprep.subr.bf16.mxu0 0
        %734 = vmatpush1.bf16.msra.mxu0 %v724
        %735 = vmatprep.subr.bf16.mxu0 0
        %736 = vmatpush1.bf16.msra.mxu0 0
        %737 = vmatprep.subr.bf16.mxu0 0
        %738 = vmatpush1.bf16.msra.mxu0 0
        %739 = vmatprep.subr.bf16.mxu0 0
        %740 = vmatpush1.bf16.msra.mxu0 0
        %741 = vmatprep.subr.bf16.mxu0 0
        %742 = vmatpush1.bf16.msra.mxu0 0
        %743 = vmatprep.subr.bf16.mxu0 0
        %744 = vmatpush1.bf16.msra.mxu0 0
        %745 = vmatprep.subr.bf16.mxu0 0
        %746 = vmatpush1.bf16.msra.mxu0 0
        %747 = vmatprep.subr.bf16.mxu0 0
        %748 = vmatpush1.bf16.msra.mxu0 0
        %749 = vmatprep.subr.bf16.mxu0 0
        %750 = vmatpush1.bf16.msra.mxu0 0
        %751 = vmatprep.subr.bf16.mxu0 0
        %752 = vmatpush1.bf16.msra.mxu0 0
        %753 = vmatprep.subr.bf16.mxu0 0
        %754 = vmatpush1.bf16.msra.mxu0 0
        %755 = vmatprep.subr.bf16.mxu0 0
        %756 = vmatpush1.bf16.msra.mxu0 0
        %757 = vmatprep.subr.bf16.mxu0 0
        %758 = vmatpush1.bf16.msra.mxu0 0
        %759 = vmatprep.subr.bf16.mxu0 0
        %760 = vmatpush1.bf16.msra.mxu0 0
        %761 = vmatprep.subr.bf16.mxu0 0
        %762 = vmatpush1.bf16.msra.mxu0 0
        %763 = vmatprep.mubr.bf16.mxu0 0
        %764 = vmatmul.mubr.bf16.gmra.mrb[0].mxu0 %v729
        %v765 = vpop.f32.mrb[0].mxu0
        %v766 = vadd.f32 %v713, %v765
        %v767 = vpop.f32.mrb[0].mxu0
        %v768 = vpop.f32.mrb[0].mxu0
        %v769 = vpop.f32.mrb[0].mxu0
        %770 = vdwg.mxu0
        %772 = vrot.lane.b32.xlu0 %v766, 120
        %v773 = vpop.permute.xlu0 %772
        %775 = vrot.lane.b32.xlu0 %v766, 112
        %v776 = vpop.permute.xlu0 %775
        %778 = vrot.lane.b32.xlu0 %v766, 104
        %v779 = vpop.permute.xlu0 %778
        %v781 = vpack.c.bf16 %v766, %v766
        %v782 = vpack.c.bf16 %v773, %v773
        %v783 = vpack.c.bf16 %v776, %v776
        %v784 = vpack.c.bf16 %v779, %v779
        %786 = vrot.lane.b32.xlu0 %v781, 96
        %v787 = vpop.permute.xlu0 %786
        %vm788 = vcmask 64512
        %v790 = vsel %vm788, %v781, 0
        %v793 = vsel %vm788, %v787, 0
        %795 = vmatprep.subr.bf16.mxu0 0
        %796 = vmatpush1.bf16.xpose.msra.mxu0 %v793
        %797 = vmatprep.subr.bf16.mxu0 0
        %798 = vmatpush1.bf16.xpose.msra.mxu0 0
        %799 = vmatprep.subr.bf16.mxu0 0
        %800 = vmatpush1.bf16.xpose.msra.mxu0 0
        %801 = vmatprep.subr.bf16.mxu0 0
        %802 = vmatpush1.bf16.xpose.msra.mxu0 0
        %803 = vmatprep.subr.bf16.mxu0 0
        %804 = vmatpush1.bf16.xpose.msra.mxu0 0
        %805 = vmatprep.subr.bf16.mxu0 0
        %806 = vmatpush1.bf16.xpose.msra.mxu0 0
        %807 = vmatprep.subr.bf16.mxu0 0
        %808 = vmatpush1.bf16.xpose.msra.mxu0 0
        %809 = vmatprep.subr.bf16.mxu0 0
        %810 = vmatpush1.bf16.xpose.msra.mxu0 0
        %811 = vmatprep.subr.bf16.mxu0 0
        %812 = vmatpush1.bf16.xpose.msra.mxu0 0
        %813 = vmatprep.subr.bf16.mxu0 0
        %814 = vmatpush1.bf16.xpose.msra.mxu0 0
        %815 = vmatprep.subr.bf16.mxu0 0
        %816 = vmatpush1.bf16.xpose.msra.mxu0 0
        %817 = vmatprep.subr.bf16.mxu0 0
        %818 = vmatpush1.bf16.xpose.msra.mxu0 0
        %819 = vmatprep.subr.bf16.mxu0 0
        %820 = vmatpush1.bf16.xpose.msra.mxu0 0
        %821 = vmatprep.subr.bf16.mxu0 0
        %822 = vmatpush1.bf16.xpose.msra.mxu0 0
        %823 = vmatprep.subr.bf16.mxu0 0
        %824 = vmatpush1.bf16.xpose.msra.mxu0 0
        %825 = vmatprep.subr.bf16.mxu0 0
        %826 = vmatpush1.bf16.xpose.msra.mxu0 0
        %827 = vmatprep.mubr.bf16.mxu0 0
        %828 = vmatmul.mubr.bf16.gmra.mrb[0].mxu0 %v790
        %v829 = vpop.f32.mrb[0].mxu0
        %v830 = vadd.f32 0.0, %v829
        %v831 = vpop.f32.mrb[0].mxu0
        %v832 = vpop.f32.mrb[0].mxu0
        %v833 = vpop.f32.mrb[0].mxu0
        %834 = vdwg.mxu0
        %836 = vrot.lane.b32.xlu0 %v782, 96
        %v837 = vpop.permute.xlu0 %836
        %v839 = vsel %vm788, %v782, 0
        %v842 = vsel %vm788, %v837, 0
        %844 = vmatprep.subr.bf16.mxu0 0
        %845 = vmatpush1.bf16.xpose.msra.mxu0 %v842
        %846 = vmatprep.subr.bf16.mxu0 0
        %847 = vmatpush1.bf16.xpose.msra.mxu0 0
        %848 = vmatprep.subr.bf16.mxu0 0
        %849 = vmatpush1.bf16.xpose.msra.mxu0 0
        %850 = vmatprep.subr.bf16.mxu0 0
        %851 = vmatpush1.bf16.xpose.msra.mxu0 0
        %852 = vmatprep.subr.bf16.mxu0 0
        %853 = vmatpush1.bf16.xpose.msra.mxu0 0
        %854 = vmatprep.subr.bf16.mxu0 0
        %855 = vmatpush1.bf16.xpose.msra.mxu0 0
        %856 = vmatprep.subr.bf16.mxu0 0
        %857 = vmatpush1.bf16.xpose.msra.mxu0 0
        %858 = vmatprep.subr.bf16.mxu0 0
        %859 = vmatpush1.bf16.xpose.msra.mxu0 0
        %860 = vmatprep.subr.bf16.mxu0 0
        %861 = vmatpush1.bf16.xpose.msra.mxu0 0
        %862 = vmatprep.subr.bf16.mxu0 0
        %863 = vmatpush1.bf16.xpose.msra.mxu0 0
        %864 = vmatprep.subr.bf16.mxu0 0
        %865 = vmatpush1.bf16.xpose.msra.mxu0 0
        %866 = vmatprep.subr.bf16.mxu0 0
        %867 = vmatpush1.bf16.xpose.msra.mxu0 0
        %868 = vmatprep.subr.bf16.mxu0 0
        %869 = vmatpush1.bf16.xpose.msra.mxu0 0
        %870 = vmatprep.subr.bf16.mxu0 0
        %871 = vmatpush1.bf16.xpose.msra.mxu0 0
        %872 = vmatprep.subr.bf16.mxu0 0
        %873 = vmatpush1.bf16.xpose.msra.mxu0 0
        %874 = vmatprep.subr.bf16.mxu0 0
        %875 = vmatpush1.bf16.xpose.msra.mxu0 0
        %876 = vmatprep.mubr.bf16.mxu0 0
        %877 = vmatmul.mubr.bf16.gmra.mrb[0].mxu0 %v839
        %v878 = vpop.f32.mrb[0].mxu0
        %v879 = vadd.f32 0.0, %v878
        %v880 = vpop.f32.mrb[0].mxu0
        %v881 = vpop.f32.mrb[0].mxu0
        %v882 = vpop.f32.mrb[0].mxu0
        %883 = vdwg.mxu0
        %885 = vrot.lane.b32.xlu0 %v783, 96
        %v886 = vpop.permute.xlu0 %885
        %v888 = vsel %vm788, %v783, 0
        %v891 = vsel %vm788, %v886, 0
        %893 = vmatprep.subr.bf16.mxu0 0
        %894 = vmatpush1.bf16.xpose.msra.mxu0 %v891
        %895 = vmatprep.subr.bf16.mxu0 0
        %896 = vmatpush1.bf16.xpose.msra.mxu0 0
        %897 = vmatprep.subr.bf16.mxu0 0
        %898 = vmatpush1.bf16.xpose.msra.mxu0 0
        %899 = vmatprep.subr.bf16.mxu0 0
        %900 = vmatpush1.bf16.xpose.msra.mxu0 0
        %901 = vmatprep.subr.bf16.mxu0 0
        %902 = vmatpush1.bf16.xpose.msra.mxu0 0
        %903 = vmatprep.subr.bf16.mxu0 0
        %904 = vmatpush1.bf16.xpose.msra.mxu0 0
        %905 = vmatprep.subr.bf16.mxu0 0
        %906 = vmatpush1.bf16.xpose.msra.mxu0 0
        %907 = vmatprep.subr.bf16.mxu0 0
        %908 = vmatpush1.bf16.xpose.msra.mxu0 0
        %909 = vmatprep.subr.bf16.mxu0 0
        %910 = vmatpush1.bf16.xpose.msra.mxu0 0
        %911 = vmatprep.subr.bf16.mxu0 0
        %912 = vmatpush1.bf16.xpose.msra.mxu0 0
        %913 = vmatprep.subr.bf16.mxu0 0
        %914 = vmatpush1.bf16.xpose.msra.mxu0 0
        %915 = vmatprep.subr.bf16.mxu0 0
        %916 = vmatpush1.bf16.xpose.msra.mxu0 0
        %917 = vmatprep.subr.bf16.mxu0 0
        %918 = vmatpush1.bf16.xpose.msra.mxu0 0
        %919 = vmatprep.subr.bf16.mxu0 0
        %920 = vmatpush1.bf16.xpose.msra.mxu0 0
        %921 = vmatprep.subr.bf16.mxu0 0
        %922 = vmatpush1.bf16.xpose.msra.mxu0 0
        %923 = vmatprep.subr.bf16.mxu0 0
        %924 = vmatpush1.bf16.xpose.msra.mxu0 0
        %925 = vmatprep.mubr.bf16.mxu0 0
        %926 = vmatmul.mubr.bf16.gmra.mrb[0].mxu0 %v888
        %v927 = vpop.f32.mrb[0].mxu0
        %v928 = vadd.f32 0.0, %v927
        %v929 = vpop.f32.mrb[0].mxu0
        %v930 = vpop.f32.mrb[0].mxu0
        %v931 = vpop.f32.mrb[0].mxu0
        %932 = vdwg.mxu0
        %934 = vrot.lane.b32.xlu0 %v784, 96
        %v935 = vpop.permute.xlu0 %934
        %v937 = vsel %vm788, %v784, 0
        %v940 = vsel %vm788, %v935, 0
        %942 = vmatprep.subr.bf16.mxu0 0
        %943 = vmatpush1.bf16.xpose.msra.mxu0 %v940
        %944 = vmatprep.subr.bf16.mxu0 0
        %945 = vmatpush1.bf16.xpose.msra.mxu0 0
        %946 = vmatprep.subr.bf16.mxu0 0
        %947 = vmatpush1.bf16.xpose.msra.mxu0 0
        %948 = vmatprep.subr.bf16.mxu0 0
        %949 = vmatpush1.bf16.xpose.msra.mxu0 0
        %950 = vmatprep.subr.bf16.mxu0 0
        %951 = vmatpush1.bf16.xpose.msra.mxu0 0
        %952 = vmatprep.subr.bf16.mxu0 0
        %953 = vmatpush1.bf16.xpose.msra.mxu0 0
        %954 = vmatprep.subr.bf16.mxu0 0
        %955 = vmatpush1.bf16.xpose.msra.mxu0 0
        %956 = vmatprep.subr.bf16.mxu0 0
        %957 = vmatpush1.bf16.xpose.msra.mxu0 0
        %958 = vmatprep.subr.bf16.mxu0 0
        %959 = vmatpush1.bf16.xpose.msra.mxu0 0
        %960 = vmatprep.subr.bf16.mxu0 0
        %961 = vmatpush1.bf16.xpose.msra.mxu0 0
        %962 = vmatprep.subr.bf16.mxu0 0
        %963 = vmatpush1.bf16.xpose.msra.mxu0 0
        %964 = vmatprep.subr.bf16.mxu0 0
        %965 = vmatpush1.bf16.xpose.msra.mxu0 0
        %966 = vmatprep.subr.bf16.mxu0 0
        %967 = vmatpush1.bf16.xpose.msra.mxu0 0
        %968 = vmatprep.subr.bf16.mxu0 0
        %969 = vmatpush1.bf16.xpose.msra.mxu0 0
        %970 = vmatprep.subr.bf16.mxu0 0
        %971 = vmatpush1.bf16.xpose.msra.mxu0 0
        %972 = vmatprep.subr.bf16.mxu0 0
        %973 = vmatpush1.bf16.xpose.msra.mxu0 0
        %974 = vmatprep.mubr.bf16.mxu0 0
        %975 = vmatmul.mubr.bf16.gmra.mrb[0].mxu0 %v937
        %v976 = vpop.f32.mrb[0].mxu0
        %v977 = vadd.f32 0.0, %v976
        %v978 = vpop.f32.mrb[0].mxu0
        %v979 = vpop.f32.mrb[0].mxu0
        %v980 = vpop.f32.mrb[0].mxu0
        %981 = vdwg.mxu0
        %v982 = vsel %vm788, %v830, -inf
        %983 = vmax.xlane.f32.xlu0 %v982
        %v984 = vpop.xlane.xlu0 %983
        %v985 = vsel %vm788, %v879, -inf
        %986 = vmax.xlane.f32.xlu0 %v985
        %v987 = vpop.xlane.xlu0 %986
        %v988 = vsel %vm788, %v928, -inf
        %989 = vmax.xlane.f32.xlu0 %v988
        %v990 = vpop.xlane.xlu0 %989
        %v991 = vsel %vm788, %v977, -inf
        %992 = vmax.xlane.f32.xlu0 %v991
        %v993 = vpop.xlane.xlu0 %992
        %v994 = vsub.f32 %v830, %v984
        %v995 = vsub.f32 %v879, %v987
        %v996 = vsub.f32 %v928, %v990
        %v997 = vsub.f32 %v977, %v993
        %v998 = vmul.f32 %v994, 1.442695
        %v999 = vpow.pop %v998
        %v1000 = vmul.f32 %v995, 1.442695
        %v1001 = vpow.pop %v1000
        %v1002 = vmul.f32 %v996, 1.442695
        %v1003 = vpow.pop %v1002
        %v1004 = vmul.f32 %v997, 1.442695
        %v1005 = vpow.pop %v1004
        %v1006 = vsel %vm788, %v999, 0.0
        %1007 = vadd.xlane.f32.xlu0 %v1006
        %v1008 = vpop.xlane.xlu0 %1007
        %v1009 = vsel %vm788, %v1001, 0.0
        %1010 = vadd.xlane.f32.xlu0 %v1009
        %v1011 = vpop.xlane.xlu0 %1010
        %v1012 = vsel %vm788, %v1003, 0.0
        %1013 = vadd.xlane.f32.xlu0 %v1012
        %v1014 = vpop.xlane.xlu0 %1013
        %v1015 = vsel %vm788, %v1005, 0.0
        %1016 = vadd.xlane.f32.xlu0 %v1015
        %v1017 = vpop.xlane.xlu0 %1016
        %v1018 = vrcp.pop %v1008
        %v1019 = vmul.f32 %v999, %v1018
        %v1020 = vrcp.pop %v1011
        %v1021 = vmul.f32 %v1001, %v1020
        %v1022 = vrcp.pop %v1014
        %v1023 = vmul.f32 %v1003, %v1022
        %v1024 = vrcp.pop %v1017
        %v1025 = vmul.f32 %v1005, %v1024
        %v1026 = vpack.c.bf16 %v1019, %v1019
        %v1027 = vpack.c.bf16 %v1021, %v1021
        %v1028 = vpack.c.bf16 %v1023, %v1023
        %v1029 = vpack.c.bf16 %v1025, %v1025
        %1030 = vrot.lane.b32.xlu0 %v781, 64
        %v1031 = vpop.permute.xlu0 %1030
        %v1033 = vsel %vm788, %v1026, 0
        %vm1035 = vcmask 1043456
        %v1037 = vsel %vm1035, %v1031, 0
        %1039 = vmatprep.subr.bf16.mxu0 0
        %1040 = vmatpush1.bf16.msra.mxu0 %v1037
        %1041 = vmatprep.subr.bf16.mxu0 0
        %1042 = vmatpush1.bf16.msra.mxu0 0
        %1043 = vmatprep.subr.bf16.mxu0 0
        %1044 = vmatpush1.bf16.msra.mxu0 0
        %1045 = vmatprep.subr.bf16.mxu0 0
        %1046 = vmatpush1.bf16.msra.mxu0 0
        %1047 = vmatprep.subr.bf16.mxu0 0
        %1048 = vmatpush1.bf16.msra.mxu0 0
        %1049 = vmatprep.subr.bf16.mxu0 0
        %1050 = vmatpush1.bf16.msra.mxu0 0
        %1051 = vmatprep.subr.bf16.mxu0 0
        %1052 = vmatpush1.bf16.msra.mxu0 0
        %1053 = vmatprep.subr.bf16.mxu0 0
        %1054 = vmatpush1.bf16.msra.mxu0 0
        %1055 = vmatprep.subr.bf16.mxu0 0
        %1056 = vmatpush1.bf16.msra.mxu0 0
        %1057 = vmatprep.subr.bf16.mxu0 0
        %1058 = vmatpush1.bf16.msra.mxu0 0
        %1059 = vmatprep.subr.bf16.mxu0 0
        %1060 = vmatpush1.bf16.msra.mxu0 0
        %1061 = vmatprep.subr.bf16.mxu0 0
        %1062 = vmatpush1.bf16.msra.mxu0 0
        %1063 = vmatprep.subr.bf16.mxu0 0
        %1064 = vmatpush1.bf16.msra.mxu0 0
        %1065 = vmatprep.subr.bf16.mxu0 0
        %1066 = vmatpush1.bf16.msra.mxu0 0
        %1067 = vmatprep.subr.bf16.mxu0 0
        %1068 = vmatpush1.bf16.msra.mxu0 0
        %1069 = vmatprep.subr.bf16.mxu0 0
        %1070 = vmatpush1.bf16.msra.mxu0 0
        %1071 = vmatprep.mubr.bf16.mxu0 0
        %1072 = vmatmul.mubr.bf16.gmra.mrb[0].mxu0 %v1033
        %v1073 = vpop.f32.mrb[0].mxu0
        %v1074 = vadd.f32 0.0, %v1073
        %v1075 = vpop.f32.mrb[0].mxu0
        %v1076 = vpop.f32.mrb[0].mxu0
        %v1077 = vpop.f32.mrb[0].mxu0
        %1078 = vdwg.mxu0
        %1079 = vrot.lane.b32.xlu0 %v782, 64
        %v1080 = vpop.permute.xlu0 %1079
        %v1082 = vsel %vm788, %v1027, 0
        %v1085 = vsel %vm1035, %v1080, 0
        %1087 = vmatprep.subr.bf16.mxu0 0
        %1088 = vmatpush1.bf16.msra.mxu0 %v1085
        %1089 = vmatprep.subr.bf16.mxu0 0
        %1090 = vmatpush1.bf16.msra.mxu0 0
        %1091 = vmatprep.subr.bf16.mxu0 0
        %1092 = vmatpush1.bf16.msra.mxu0 0
        %1093 = vmatprep.subr.bf16.mxu0 0
        %1094 = vmatpush1.bf16.msra.mxu0 0
        %1095 = vmatprep.subr.bf16.mxu0 0
        %1096 = vmatpush1.bf16.msra.mxu0 0
        %1097 = vmatprep.subr.bf16.mxu0 0
        %1098 = vmatpush1.bf16.msra.mxu0 0
        %1099 = vmatprep.subr.bf16.mxu0 0
        %1100 = vmatpush1.bf16.msra.mxu0 0
        %1101 = vmatprep.subr.bf16.mxu0 0
        %1102 = vmatpush1.bf16.msra.mxu0 0
        %1103 = vmatprep.subr.bf16.mxu0 0
        %1104 = vmatpush1.bf16.msra.mxu0 0
        %1105 = vmatprep.subr.bf16.mxu0 0
        %1106 = vmatpush1.bf16.msra.mxu0 0
        %1107 = vmatprep.subr.bf16.mxu0 0
        %1108 = vmatpush1.bf16.msra.mxu0 0
        %1109 = vmatprep.subr.bf16.mxu0 0
        %1110 = vmatpush1.bf16.msra.mxu0 0
        %1111 = vmatprep.subr.bf16.mxu0 0
        %1112 = vmatpush1.bf16.msra.mxu0 0
        %1113 = vmatprep.subr.bf16.mxu0 0
        %1114 = vmatpush1.bf16.msra.mxu0 0
        %1115 = vmatprep.subr.bf16.mxu0 0
        %1116 = vmatpush1.bf16.msra.mxu0 0
        %1117 = vmatprep.subr.bf16.mxu0 0
        %1118 = vmatpush1.bf16.msra.mxu0 0
        %1119 = vmatprep.mubr.bf16.mxu0 0
        %1120 = vmatmul.mubr.bf16.gmra.mrb[0].mxu0 %v1082
        %v1121 = vpop.f32.mrb[0].mxu0
        %v1122 = vadd.f32 0.0, %v1121
        %v1123 = vpop.f32.mrb[0].mxu0
        %v1124 = vpop.f32.mrb[0].mxu0
        %v1125 = vpop.f32.mrb[0].mxu0
        %1126 = vdwg.mxu0
        %1127 = vrot.lane.b32.xlu0 %v783, 64
        %v1128 = vpop.permute.xlu0 %1127
        %v1130 = vsel %vm788, %v1028, 0
        %v1133 = vsel %vm1035, %v1128, 0
        %1135 = vmatprep.subr.bf16.mxu0 0
        %1136 = vmatpush1.bf16.msra.mxu0 %v1133
        %1137 = vmatprep.subr.bf16.mxu0 0
        %1138 = vmatpush1.bf16.msra.mxu0 0
        %1139 = vmatprep.subr.bf16.mxu0 0
        %1140 = vmatpush1.bf16.msra.mxu0 0
        %1141 = vmatprep.subr.bf16.mxu0 0
        %1142 = vmatpush1.bf16.msra.mxu0 0
        %1143 = vmatprep.subr.bf16.mxu0 0
        %1144 = vmatpush1.bf16.msra.mxu0 0
        %1145 = vmatprep.subr.bf16.mxu0 0
        %1146 = vmatpush1.bf16.msra.mxu0 0
        %1147 = vmatprep.subr.bf16.mxu0 0
        %1148 = vmatpush1.bf16.msra.mxu0 0
        %1149 = vmatprep.subr.bf16.mxu0 0
        %1150 = vmatpush1.bf16.msra.mxu0 0
        %1151 = vmatprep.subr.bf16.mxu0 0
        %1152 = vmatpush1.bf16.msra.mxu0 0
        %1153 = vmatprep.subr.bf16.mxu0 0
        %1154 = vmatpush1.bf16.msra.mxu0 0
        %1155 = vmatprep.subr.bf16.mxu0 0
        %1156 = vmatpush1.bf16.msra.mxu0 0
        %1157 = vmatprep.subr.bf16.mxu0 0
        %1158 = vmatpush1.bf16.msra.mxu0 0
        %1159 = vmatprep.subr.bf16.mxu0 0
        %1160 = vmatpush1.bf16.msra.mxu0 0
        %1161 = vmatprep.subr.bf16.mxu0 0
        %1162 = vmatpush1.bf16.msra.mxu0 0
        %1163 = vmatprep.subr.bf16.mxu0 0
        %1164 = vmatpush1.bf16.msra.mxu0 0
        %1165 = vmatprep.subr.bf16.mxu0 0
        %1166 = vmatpush1.bf16.msra.mxu0 0
        %1167 = vmatprep.mubr.bf16.mxu0 0
        %1168 = vmatmul.mubr.bf16.gmra.mrb[0].mxu0 %v1130
        %v1169 = vpop.f32.mrb[0].mxu0
        %v1170 = vadd.f32 0.0, %v1169
        %v1171 = vpop.f32.mrb[0].mxu0
        %v1172 = vpop.f32.mrb[0].mxu0
        %v1173 = vpop.f32.mrb[0].mxu0
        %1174 = vdwg.mxu0
        %1175 = vrot.lane.b32.xlu0 %v784, 64
        %v1176 = vpop.permute.xlu0 %1175
        %v1178 = vsel %vm788, %v1029, 0
        %v1181 = vsel %vm1035, %v1176, 0
        %1183 = vmatprep.subr.bf16.mxu0 0
        %1184 = vmatpush1.bf16.msra.mxu0 %v1181
        %1185 = vmatprep.subr.bf16.mxu0 0
        %1186 = vmatpush1.bf16.msra.mxu0 0
        %1187 = vmatprep.subr.bf16.mxu0 0
        %1188 = vmatpush1.bf16.msra.mxu0 0
        %1189 = vmatprep.subr.bf16.mxu0 0
        %1190 = vmatpush1.bf16.msra.mxu0 0
        %1191 = vmatprep.subr.bf16.mxu0 0
        %1192 = vmatpush1.bf16.msra.mxu0 0
        %1193 = vmatprep.subr.bf16.mxu0 0
        %1194 = vmatpush1.bf16.msra.mxu0 0
        %1195 = vmatprep.subr.bf16.mxu0 0
        %1196 = vmatpush1.bf16.msra.mxu0 0
        %1197 = vmatprep.subr.bf16.mxu0 0
        %1198 = vmatpush1.bf16.msra.mxu0 0
        %1199 = vmatprep.subr.bf16.mxu0 0
        %1200 = vmatpush1.bf16.msra.mxu0 0
        %1201 = vmatprep.subr.bf16.mxu0 0
        %1202 = vmatpush1.bf16.msra.mxu0 0
        %1203 = vmatprep.subr.bf16.mxu0 0
        %1204 = vmatpush1.bf16.msra.mxu0 0
        %1205 = vmatprep.subr.bf16.mxu0 0
        %1206 = vmatpush1.bf16.msra.mxu0 0
        %1207 = vmatprep.subr.bf16.mxu0 0
        %1208 = vmatpush1.bf16.msra.mxu0 0
        %1209 = vmatprep.subr.bf16.mxu0 0
        %1210 = vmatpush1.bf16.msra.mxu0 0
        %1211 = vmatprep.subr.bf16.mxu0 0
        %1212 = vmatpush1.bf16.msra.mxu0 0
        %1213 = vmatprep.subr.bf16.mxu0 0
        %1214 = vmatpush1.bf16.msra.mxu0 0
        %1215 = vmatprep.mubr.bf16.mxu0 0
        %1216 = vmatmul.mubr.bf16.gmra.mrb[0].mxu0 %v1178
        %v1217 = vpop.f32.mrb[0].mxu0
        %v1218 = vadd.f32 0.0, %v1217
        %v1219 = vpop.f32.mrb[0].mxu0
        %v1220 = vpop.f32.mrb[0].mxu0
        %v1221 = vpop.f32.mrb[0].mxu0
        %1222 = vdwg.mxu0
        %1224 = vrot.lane.b32.xlu0 %v1122, 8
        %v1225 = vpop.permute.xlu0 %1224
        %1228 = vrot.lane.b32.xlu0 %v1170, 16
        %v1229 = vpop.permute.xlu0 %1228
        %1232 = vrot.lane.b32.xlu0 %v1218, 24
        %v1233 = vpop.permute.xlu0 %1232
        %v1235 = vsel %vm788, %v1074, %v1225
        %vm1236 = vcmask 130048
        %v1237 = vsel %vm1236, %v1235, %v1229
        %vm1238 = vcmask 195584
        %v1239 = vsel %vm1238, %v1237, %v1233
        %v1240 = vpack.c.bf16 %v1239, %v1239
        %v1241 = vld [vmem:[%s662] sm:$0xf]
        %v1242 = vld [vmem:[%s662 + $0x4] sm:$0xf]
        %v1243 = vld [vmem:[%s662 + $0x8] sm:$0xf]
        %v1244 = vld [vmem:[%s662 + $0xc] sm:$0xf]
        %v1245 = vld [vmem:[%s665] sm:$0x1]
        %v1247 = vlaneseq
        %v1248 = vshrl.u32 %v1247, 7
        %v1249 = vsub.s32 0, %v1248
        %v1250 = vrot.slane %v1245, %v1249
        %v1256 = vunpack.c.l.b16 %v1241
        %v1257 = vunpack.c.l.b16 %v1242
        %v1258 = vunpack.c.l.b16 %v1243
        %v1259 = vunpack.c.l.b16 %v1244
        %v1260 = vpack.c.b16 %v1257, %v1256
        %v1261 = vpack.c.b16 %v1259, %v1258
        %v1265 = vsel %vm727, %v1240, 0
        %1267 = vmatprep.subr.bf16.mxu0 0
        %1268 = vmatpush1.bf16.msra.mxu0 %v1260
        %1269 = vmatprep.subr.bf16.mxu0 0
        %1270 = vmatpush1.bf16.msra.mxu0 %v1261
        %1271 = vmatprep.subr.bf16.mxu0 0
        %1272 = vmatpush1.bf16.msra.mxu0 0
        %1273 = vmatprep.subr.bf16.mxu0 0
        %1274 = vmatpush1.bf16.msra.mxu0 0
        %1275 = vmatprep.subr.bf16.mxu0 0
        %1276 = vmatpush1.bf16.msra.mxu0 0
        %1277 = vmatprep.subr.bf16.mxu0 0
        %1278 = vmatpush1.bf16.msra.mxu0 0
        %1279 = vmatprep.subr.bf16.mxu0 0
        %1280 = vmatpush1.bf16.msra.mxu0 0
        %1281 = vmatprep.subr.bf16.mxu0 0
        %1282 = vmatpush1.bf16.msra.mxu0 0
        %1283 = vmatprep.subr.bf16.mxu0 0
        %1284 = vmatpush1.bf16.msra.mxu0 0
        %1285 = vmatprep.subr.bf16.mxu0 0
        %1286 = vmatpush1.bf16.msra.mxu0 0
        %1287 = vmatprep.subr.bf16.mxu0 0
        %1288 = vmatpush1.bf16.msra.mxu0 0
        %1289 = vmatprep.subr.bf16.mxu0 0
        %1290 = vmatpush1.bf16.msra.mxu0 0
        %1291 = vmatprep.subr.bf16.mxu0 0
        %1292 = vmatpush1.bf16.msra.mxu0 0
        %1293 = vmatprep.subr.bf16.mxu0 0
        %1294 = vmatpush1.bf16.msra.mxu0 0
        %1295 = vmatprep.subr.bf16.mxu0 0
        %1296 = vmatpush1.bf16.msra.mxu0 0
        %1297 = vmatprep.subr.bf16.mxu0 0
        %1298 = vmatpush1.bf16.msra.mxu0 0
        %1299 = vmatprep.mubr.bf16.mxu0 0
        %1300 = vmatmul.mubr.bf16.gmra.mrb[0].mxu0 %v1265
        %v1301 = vpop.f32.mrb[0].mxu0
        %v1302 = vadd.f32 %v1250, %v1301
        %v1303 = vpop.f32.mrb[0].mxu0
        %v1304 = vpop.f32.mrb[0].mxu0
        %v1305 = vpop.f32.mrb[0].mxu0
        %1306 = vdwg.mxu0
        %v1307 = vadd.f32 %v702, %v1302
        %v1308 = vld [vmem:[%s668] sm:$0x1]
        %v1309 = vld [vmem:[%s671] sm:$0x1]
        %v1310 = vsel %vm727, %v1307, 0.0
        %1311 = vadd.xlane.f32.xlu0 %v1310
        %v1312 = vpop.xlane.xlu0 %1311
        %v1313 = vrcp.pop 32.0
        %v1314 = vmul.f32 %v1312, %v1313
        %v1315 = vsub.f32 %v1307, %v1314
        %v1316 = vmul.f32 %v1315, %v1315
        %v1317 = vsel %vm727, %v1316, 0.0
        %1318 = vadd.xlane.f32.xlu0 %v1317
        %v1319 = vpop.xlane.xlu0 %1318
        %v1320 = vmul.f32 %v1319, %v1313
        %v1321 = vadd.f32 %v1320, 1e-05
        %v1322 = vrsqrt.pop %v1321
        %v1323 = vmul.f32 %v1315, %v1322
        %v1325 = vlaneseq
        %v1326 = vshrl.u32 %v1325, 7
        %v1327 = vsub.s32 0, %v1326
        %v1328 = vrot.slane %v1308, %v1327
        %v1330 = vmul.f32 %v1323, %v1328
        %v1332 = vlaneseq
        %v1333 = vshrl.u32 %v1332, 7
        %v1334 = vsub.s32 0, %v1333
        %v1335 = vrot.slane %v1309, %v1334
        %v1337 = vadd.f32 %v1330, %v1335
        %v1338 = vpack.c.bf16 %v1337, %v1337
        %v1339 = vld [vmem:[%s676] sm:$0xf]
        %v1340 = vld [vmem:[%s676 + $0x4] sm:$0xf]
        %v1341 = vld [vmem:[%s676 + $0x8] sm:$0xf]
        %v1342 = vld [vmem:[%s676 + $0xc] sm:$0xf]
        %v1343 = vld [vmem:[%s679] sm:$0x1]
        %v1345 = vlaneseq
        %v1346 = vshrl.u32 %v1345, 7
        %v1347 = vsub.s32 0, %v1346
        %v1348 = vrot.slane %v1343, %v1347
        %v1354 = vunpack.c.l.b16 %v1339
        %v1355 = vunpack.c.l.b16 %v1340
        %v1356 = vunpack.c.l.b16 %v1341
        %v1357 = vunpack.c.l.b16 %v1342
        %v1358 = vpack.c.b16 %v1355, %v1354
        %v1359 = vpack.c.b16 %v1357, %v1356
        %v1363 = vsel %vm727, %v1338, 0
        %1365 = vmatprep.subr.bf16.mxu0 0
        %1366 = vmatpush1.bf16.msra.mxu0 %v1358
        %1367 = vmatprep.subr.bf16.mxu0 0
        %1368 = vmatpush1.bf16.msra.mxu0 %v1359
        %1369 = vmatprep.subr.bf16.mxu0 0
        %1370 = vmatpush1.bf16.msra.mxu0 0
        %1371 = vmatprep.subr.bf16.mxu0 0
        %1372 = vmatpush1.bf16.msra.mxu0 0
        %1373 = vmatprep.subr.bf16.mxu0 0
        %1374 = vmatpush1.bf16.msra.mxu0 0
        %1375 = vmatprep.subr.bf16.mxu0 0
        %1376 = vmatpush1.bf16.msra.mxu0 0
        %1377 = vmatprep.subr.bf16.mxu0 0
        %1378 = vmatpush1.bf16.msra.mxu0 0
        %1379 = vmatprep.subr.bf16.mxu0 0
        %1380 = vmatpush1.bf16.msra.mxu0 0
        %1381 = vmatprep.subr.bf16.mxu0 0
        %1382 = vmatpush1.bf16.msra.mxu0 0
        %1383 = vmatprep.subr.bf16.mxu0 0
        %1384 = vmatpush1.bf16.msra.mxu0 0
        %1385 = vmatprep.subr.bf16.mxu0 0
        %1386 = vmatpush1.bf16.msra.mxu0 0
        %1387 = vmatprep.subr.bf16.mxu0 0
        %1388 = vmatpush1.bf16.msra.mxu0 0
        %1389 = vmatprep.subr.bf16.mxu0 0
        %1390 = vmatpush1.bf16.msra.mxu0 0
        %1391 = vmatprep.subr.bf16.mxu0 0
        %1392 = vmatpush1.bf16.msra.mxu0 0
        %1393 = vmatprep.subr.bf16.mxu0 0
        %1394 = vmatpush1.bf16.msra.mxu0 0
        %1395 = vmatprep.subr.bf16.mxu0 0
        %1396 = vmatpush1.bf16.msra.mxu0 0
        %1397 = vmatprep.mubr.bf16.mxu0 0
        %1398 = vmatmul.mubr.bf16.gmra.mrb[0].mxu0 %v1363
        %v1399 = vpop.f32.mrb[0].mxu0
        %v1400 = vadd.f32 %v1348, %v1399
        %v1401 = vpop.f32.mrb[0].mxu0
        %v1402 = vpop.f32.mrb[0].mxu0
        %v1403 = vpop.f32.mrb[0].mxu0
        %1404 = vdwg.mxu0
        %v1405 = vmax.f32 %v1400, 0.0
        %v1406 = vpack.c.bf16 %v1405, %v1405
        %v1407 = vld [vmem:[%s684] sm:$0xf]
        %v1408 = vld [vmem:[%s684 + $0x4] sm:$0xf]
        %v1409 = vld [vmem:[%s684 + $0x8] sm:$0xf]
        %v1410 = vld [vmem:[%s684 + $0xc] sm:$0xf]
        %v1411 = vld [vmem:[%s684 + $0x10] sm:$0xf]
        %v1412 = vld [vmem:[%s684 + $0x14] sm:$0xf]
        %v1413 = vld [vmem:[%s684 + $0x18] sm:$0xf]
        %v1414 = vld [vmem:[%s684 + $0x1c] sm:$0xf]
        %v1415 = vld [vmem:[%s687] sm:$0x1]
        %v1417 = vlaneseq
        %v1418 = vshrl.u32 %v1417, 7
        %v1419 = vsub.s32 0, %v1418
        %v1420 = vrot.slane %v1415, %v1419
        %v1430 = vunpack.c.l.b16 %v1407
        %v1431 = vunpack.c.l.b16 %v1408
        %v1432 = vunpack.c.l.b16 %v1409
        %v1433 = vunpack.c.l.b16 %v1410
        %v1434 = vunpack.c.l.b16 %v1411
        %v1435 = vunpack.c.l.b16 %v1412
        %v1436 = vunpack.c.l.b16 %v1413
        %v1437 = vunpack.c.l.b16 %v1414
        %v1438 = vpack.c.b16 %v1431, %v1430
        %v1439 = vpack.c.b16 %v1433, %v1432
        %v1440 = vpack.c.b16 %v1435, %v1434
        %v1441 = vpack.c.b16 %v1437, %v1436
        %vm1446 = vcmask 523264
        %v1448 = vsel %vm1446, %v1406, 0
        %1450 = vmatprep.subr.bf16.mxu0 0
        %1451 = vmatpush1.bf16.msra.mxu0 %v1438
        %1452 = vmatprep.subr.bf16.mxu0 0
        %1453 = vmatpush1.bf16.msra.mxu0 %v1439
        %1454 = vmatprep.subr.bf16.mxu0 0
        %1455 = vmatpush1.bf16.msra.mxu0 %v1440
        %1456 = vmatprep.subr.bf16.mxu0 0
        %1457 = vmatpush1.bf16.msra.mxu0 %v1441
        %1458 = vmatprep.subr.bf16.mxu0 0
        %1459 = vmatpush1.bf16.msra.mxu0 0
        %1460 = vmatprep.subr.bf16.mxu0 0
        %1461 = vmatpush1.bf16.msra.mxu0 0
        %1462 = vmatprep.subr.bf16.mxu0 0
        %1463 = vmatpush1.bf16.msra.mxu0 0
        %1464 = vmatprep.subr.bf16.mxu0 0
        %1465 = vmatpush1.bf16.msra.mxu0 0
        %1466 = vmatprep.subr.bf16.mxu0 0
        %1467 = vmatpush1.bf16.msra.mxu0 0
        %1468 = vmatprep.subr.bf16.mxu0 0
        %1469 = vmatpush1.bf16.msra.mxu0 0
        %1470 = vmatprep.subr.bf16.mxu0 0
        %1471 = vmatpush1.bf16.msra.mxu0 0
        %1472 = vmatprep.subr.bf16.mxu0 0
        %1473 = vmatpush1.bf16.msra.mxu0 0
        %1474 = vmatprep.subr.bf16.mxu0 0
        %1475 = vmatpush1.bf16.msra.mxu0 0
        %1476 = vmatprep.subr.bf16.mxu0 0
        %1477 = vmatpush1.bf16.msra.mxu0 0
        %1478 = vmatprep.subr.bf16.mxu0 0
        %1479 = vmatpush1.bf16.msra.mxu0 0
        %1480 = vmatprep.subr.bf16.mxu0 0
        %1481 = vmatpush1.bf16.msra.mxu0 0
        %1482 = vmatprep.mubr.bf16.mxu0 0
        %1483 = vmatmul.mubr.bf16.gmra.mrb[0].mxu0 %v1448
        %v1484 = vpop.f32.mrb[0].mxu0
        %v1485 = vadd.f32 %v1420, %v1484
        %v1486 = vpop.f32.mrb[0].mxu0
        %v1487 = vpop.f32.mrb[0].mxu0
        %v1488 = vpop.f32.mrb[0].mxu0
        %1489 = vdwg.mxu0
        %v1490 = vadd.f32 %v1337, %v1485
        %v1491 = vld [vmem:[%s690] sm:$0x1]
        %v1492 = vld [vmem:[%s693] sm:$0x1]
        %v1493 = vsel %vm727, %v1490, 0.0
        %1494 = vadd.xlane.f32.xlu0 %v1493
        %v1495 = vpop.xlane.xlu0 %1494
        %v1496 = vmul.f32 %v1495, %v1313
        %v1497 = vsub.f32 %v1490, %v1496
        %v1498 = vmul.f32 %v1497, %v1497
        %v1499 = vsel %vm727, %v1498, 0.0
        %1500 = vadd.xlane.f32.xlu0 %v1499
        %v1501 = vpop.xlane.xlu0 %1500
        %v1502 = vmul.f32 %v1501, %v1313
        %v1503 = vadd.f32 %v1502, 1e-05
        %v1504 = vrsqrt.pop %v1503
        %v1505 = vmul.f32 %v1497, %v1504
        %v1507 = vlaneseq
        %v1508 = vshrl.u32 %v1507, 7
        %v1509 = vsub.s32 0, %v1508
        %v1510 = vrot.slane %v1491, %v1509
        %v1512 = vmul.f32 %v1505, %v1510
        %v1514 = vlaneseq
        %v1515 = vshrl.u32 %v1514, 7
        %v1516 = vsub.s32 0, %v1515
        %v1517 = vrot.slane %v1492, %v1516
        %v1519 = vadd.f32 %v1512, %v1517
        %p1520 = scmp.lt.s32.totalorder %s34, 1
        // Predicated region
        $region85: #{transformer_encoder.1} parent=79 // pred_check
          %p1521 = pneg %p1520
        $region86: #{transformer_encoder.1} parent=79 // pred_check_branch
          %1523 = sbr.rel (%p1521) target = $region88
        $region87: #{transformer_encoder.1} parent=79 // pred_region
          %1524 = vst.msk [vmem:[%s645] sm:$0xff] %vm727, %v1519
        $region88: #{transformer_encoder.1} parent=79 // pred_fallthru
          _
        %p1525 = scmp.eq.s32.totalorder %s34, 1
        // Predicated region
        $region89: #{transformer_encoder.1} parent=79 // pred_check
          %p1526 = pneg %p1525
        $region90: #{transformer_encoder.1} parent=79 // pred_check_branch
          %1528 = sbr.rel (%p1526) target = $region92
        $region91: #{transformer_encoder.1} parent=79 // pred_region
          %v1529 = vld [vmem:[%s13] sm:$0x1]
          %v1530 = vld [vmem:[%s14] sm:$0x1]
          %v1531 = vsel %vm727, %v1519, 0.0
          %1532 = vadd.xlane.f32.xlu0 %v1531
          %v1533 = vpop.xlane.xlu0 %1532
          %v1534 = vmul.f32 %v1533, %v1313
          %v1535 = vsub.f32 %v1519, %v1534
          %v1536 = vmul.f32 %v1535, %v1535
          %v1537 = vsel %vm727, %v1536, 0.0
          %1538 = vadd.xlane.f32.xlu0 %v1537
          %v1539 = vpop.xlane.xlu0 %1538
          %v1540 = vmul.f32 %v1539, %v1313
          %v1541 = vadd.f32 %v1540, 1e-05
          %v1542 = vrsqrt.pop %v1541
          %v1543 = vmul.f32 %v1535, %v1542
          %v1545 = vlaneseq
          %v1546 = vshrl.u32 %v1545, 7
          %v1547 = vsub.s32 0, %v1546
          %v1548 = vrot.slane %v1529, %v1547
          %v1550 = vmul.f32 %v1543, %v1548
          %v1552 = vlaneseq
          %v1553 = vshrl.u32 %v1552, 7
          %v1554 = vsub.s32 0, %v1553
          %v1555 = vrot.slane %v1530, %v1554
          %v1557 = vadd.f32 %v1550, %v1555
          %1558 = vst.msk [vmem:[%s645] sm:$0xff] %vm727, %v1557
        $region92: #{transformer_encoder.1} parent=79 // pred_fallthru
          _
        %s1559 = sand.u32 %s429, 1
        %s1560 = scalar_lea.sflag [#allocation3], %s1559
        %s1561 = sand.u32 %s429, 1
        %s1562 = smul.addr %s1561, 8
        %s1563 = scalar_lea.vmem [#allocation2], %s1562
        // Predicated region
        $region93: #{transformer_encoder.1} parent=79 // pred_check
          %p1564 = pneg %p439
        $region94: #{transformer_encoder.1} parent=79 // pred_check_branch
          %1566 = sbr.rel (%p1564) target = $region96
        $region95: #{transformer_encoder.1} parent=79 // pred_region
          %s1568 = ssub.s32 128, 128
          %1569 = vsyncadd %s1560, %s1568
          %s1570 = smul.addr %s33, 128
          %s1571 = scalar_lea.hbm %s15, %s1570
          %s1573 = sshll.u32 %s1563, 4
          %s1574 = int_to_ptr.vmem [resolvable:$true] %s1573
          %1576 = dma.vmem_to_hbm [thread:$0]  %s1574, 128, %s1571, %s1560
        $region96: #{transformer_encoder.1} parent=79 // pred_fallthru
          _
      $region80: #{transformer_encoder.1} parent=5 // pred_fallthru
        _
      %p1577 = scmp.le.s32.totalorder 2, %s24
      // Predicated region
      $region97: #{transformer_encoder.1} parent=5 // pred_check
        %p1578 = pneg %p1577
      $region98: #{transformer_encoder.1} parent=5 // pred_check_branch
        %1580 = sbr.rel (%p1578) target = $region100
      $region99: #{transformer_encoder.1} parent=5 // pred_region
        %s1581 = ssub.s32 %s24, 2
        // Predicated region
        $region101: #{transformer_encoder.1} parent=99 // pred_check
          %p1582 = pneg %p445
        $region102: #{transformer_encoder.1} parent=99 // pred_check_branch
          %1584 = sbr.rel (%p1582) target = $region104
        $region103: #{transformer_encoder.1} parent=99 // pred_region
          %s1585 = sand.u32 %s430, 1
          %s1586 = scalar_lea.sflag [#allocation3], %s1585
          %s1587 = sand.u32 %s430, 1
          %s1588 = smul.addr %s1587, 8
          %s1589 = scalar_lea.vmem [#allocation2], %s1588
          %1590 = dma.done %s1586, 128
        $region104: #{transformer_encoder.1} parent=99 // pred_fallthru
          _
      $region100: #{transformer_encoder.1} parent=5 // pred_fallthru
        _
    $region6: #{transformer_encoder.1} parent=1 // loop_footer
      %s28 = sadd.s32 1, %s24
    $region7: #{transformer_encoder.1} parent=1 // loop_footer_branch
      %23 = sbr.rel target = $region3
    $region8: #{transformer_encoder.1} parent=1 // loop_exit
      _
    %1591 = vsyncpa [#allocation3], 1
    %s1592 = scalar_lea.sflag [#allocation3], 1
    %1593 = vsyncpa %s1592, 1

</llo_original>
